<compile_context>
chip_gen: v6e
topology: v6e:2x2x1
jax: 0.10.0
libtpu: 0.0.40
codegen_flags: <defaults>
</compile_context>

<pallas_src>
from functools import partial

import numpy as np
import jax
import jax.numpy as jnp
from jax.experimental import pallas as pl
from jax.experimental.pallas import tpu as pltpu


# ---------------- fused Pallas kernel (one grid step == one block of bb images) ----------------

def _disc_fused_kernel(p1_ref, w1_ref, sel_ref, w2_ref, scale_ref, shift_ref,
                       fcw_ref, fcb_ref, o_ref):
    bb, n1, kpad = p1_ref.shape          # (bb, 64, 128)
    ntaps = w2_ref.shape[0]              # 9
    n2 = fcw_ref.shape[0]                # conv2 output positions (out_img_s**2)
    bn2 = bb * n2

    # conv1 for the whole batch block: (bb*n1, 128) @ (128, 128) -> LeakyReLU(0.2).
    p1 = p1_ref[...].reshape(bb * n1, kpad)
    y1 = jnp.dot(p1, w1_ref[...], preferred_element_type=jnp.float32)
    y1 = jnp.where(y1 > 0.0, y1, 0.2 * y1).astype(jnp.bfloat16)

    # conv2 window extraction: block-diagonal 0/1 selection matmul gathers the 9
    # strided/shifted taps for every image at once (zero rows where the 3x3 window
    # falls in the zero padding).  Output rows are ordered (tap, image, pos).
    sy = jnp.dot(sel_ref[...], y1, preferred_element_type=jnp.float32).astype(jnp.bfloat16)

    # conv2 = sum of 9 tap matmuls, each (bb*n2, 128) @ (128, 256), accumulated in f32.
    acc = jnp.dot(sy[0:bn2, :], w2_ref[0], preferred_element_type=jnp.float32)
    for t in range(1, ntaps):
        acc = acc + jnp.dot(sy[t * bn2:(t + 1) * bn2, :], w2_ref[t],
                            preferred_element_type=jnp.float32)

    # BatchNorm2d (eval, folded to per-channel affine) + LeakyReLU(0.2), in f32.
    y2 = acc * scale_ref[...] + shift_ref[...]
    y2 = jnp.where(y2 > 0.0, y2, 0.2 * y2)

    # Flatten + Dropout(0.4) (identity in eval) + Linear(n2*256 -> 1) + Sigmoid.
    # Head as VPU multiply + lane reductions instead of an M=1/N=1 MXU pass.
    # TODO(synk): Dropout(0.4) train-mode masking not implemented (identity in eval).
    y2 = y2.reshape(bb, n2, 256)
    h = jnp.sum(y2 * fcw_ref[...], axis=2)                     # (bb, n2)  lane reduce
    h = jnp.sum(h, axis=1, keepdims=True) + fcb_ref[...]       # (bb, 1)   + bias
    prob = 1.0 / (1.0 + jnp.exp(-h))
    o_ref[0] = jnp.broadcast_to(prob, (bb, 128))               # lane-dense store


# ---------------- JAX glue ----------------

def _im2col(x, k, s, p):
    """x: (B,H,W,C) NHWC -> patches (B,Ho,Wo,k*k*C) in (kh, kw, c) column order."""
    B, H, W, C = x.shape
    xp = jnp.pad(x, ((0, 0), (p, p), (p, p), (0, 0)))
    Ho = (H + 2 * p - k) // s + 1
    Wo = (W + 2 * p - k) // s + 1
    cols = []
    for di in range(k):
        for dj in range(k):
            cols.append(xp[:, di:di + (Ho - 1) * s + 1:s,
                            dj:dj + (Wo - 1) * s + 1:s, :])
    return jnp.concatenate(cols, axis=-1), Ho, Wo


def _build_conv2_selection(H1, W1, H2, W2):
    """Per-image tap selection sel[t, o, i] = 1 iff conv1-output pixel i =
    (2*oh + di - 1, 2*ow + dj - 1) feeds tap t = 3*di + dj of conv2 output o = (oh, ow)
    (all-zero where the 3x3 window hits the zero padding)."""
    sel = np.zeros((9, H2 * W2, H1 * W1), np.float32)
    for t, (di, dj) in enumerate([(a, b) for a in range(3) for b in range(3)]):
        for oh in range(H2):
            for ow in range(W2):
                ih = 2 * oh + di - 1
                iw = 2 * ow + dj - 1
                if 0 <= ih < H1 and 0 <= iw < W1:
                    sel[t, oh * W2 + ow, ih * W1 + iw] = 1.0
    return sel


def _build_block_selection(sel9, bb):
    """Block-diagonal selection for a batch block: rows ordered (tap, image, pos),
    columns ordered (image, conv1 pos) -> (9*bb*n2, bb*n1) bf16 constant."""
    ntaps, n2, n1 = sel9.shape
    blk = np.zeros((ntaps, bb, n2, bb, n1), np.float32)
    for b in range(bb):
        blk[:, b, :, b, :] = sel9
    return jnp.asarray(blk.reshape(ntaps * bb * n2, bb * n1), jnp.bfloat16)


def init_params(key, in_img_s, out_img_s, n_classes, in_channels):
    ks = jax.random.split(key, 6)
    s2 = in_img_s * in_img_s
    p = {}
    # nn.Embedding(n_classes, n_classes)
    p["emb"] = 0.1 * jax.random.normal(ks[0], (n_classes, n_classes), jnp.float32)
    # nn.Linear(n_classes, in_img_s**2)  (stored pre-transposed: (in, out))
    p["w1"] = 0.1 * jax.random.normal(ks[1], (n_classes, s2), jnp.float32)
    p["b1"] = 0.01 * jax.random.normal(ks[2], (1, s2), jnp.float32)
    # Conv2d(in_channels+1, 128, 3, 2, 1, bias=False)  (PyTorch OIHW layout)
    p["conv1_w"] = 0.1 * jax.random.normal(ks[3], (128, in_channels + 1, 3, 3), jnp.float32)
    # Conv2d(128, 256, 3, 2, 1, bias=False)
    p["conv2_w"] = 0.05 * jax.random.normal(ks[4], (256, 128, 3, 3), jnp.float32)
    # BatchNorm2d(256) parameters + running stats (eval mode)
    p["bn_gamma"] = jnp.ones((256,), jnp.float32)
    p["bn_beta"] = jnp.zeros((256,), jnp.float32)
    p["bn_mean"] = jnp.zeros((256,), jnp.float32)
    p["bn_var"] = jnp.ones((256,), jnp.float32)
    # Linear(256*out_img_s**2, 1): in-feature order is PyTorch's NCHW flatten (c, h, w).
    p["fc_w"] = 0.01 * jax.random.normal(ks[5], (256 * out_img_s * out_img_s, 1), jnp.float32)
    p["fc_b"] = jnp.zeros((1, 1), jnp.float32)
    return p


@partial(jax.jit, static_argnums=(3, 4, 5, 6))
def conditional_discriminator_forward(params, x_nchw, labels, in_img_s, out_img_s,
                                      n_classes, block_b=8):
    B = x_nchw.shape[0]

    # ----- label branch: Embedding @ Linear constant-folded into one table + gather -----
    # NOTE: jnp.take clips out-of-range labels (nn.Embedding would raise).
    table = params["emb"] @ params["w1"] + params["b1"]            # (n_classes, s^2)
    label_map = jnp.take(table, labels.astype(jnp.int32), axis=0)  # (B, s^2)
    label_map = label_map.reshape(B, in_img_s, in_img_s, 1)

    x = jnp.transpose(x_nchw, (0, 2, 3, 1))                        # NCHW -> NHWC
    x = jnp.concatenate([x, label_map], axis=-1)                   # (B, H, W, in_c+1)

    # ----- conv1 im2col at the JAX level (input side only), K zero-padded to 128 lanes -----
    patches1, H1, W1 = _im2col(x, 3, 2, 1)                          # (B, H1, W1, 9*(in_c+1))
    K1 = patches1.shape[-1]
    KPAD = 128
    n1 = H1 * W1

    # ----- batch blocking: bb images per grid step (amortizes per-step overhead) -----
    bb = max(1, min(block_b, B))
    nb = pl.cdiv(B, bb)
    B_pad = nb * bb

    p1 = patches1.reshape(B, n1, K1)
    p1 = jnp.pad(p1, ((0, B_pad - B), (0, 0), (0, KPAD - K1))).astype(jnp.bfloat16)

    # conv weights in matmul layout (kh, kw, cin, cout), bf16.
    w1c = jnp.transpose(params["conv1_w"], (2, 3, 1, 0)).reshape(K1, 128)
    w1c = jnp.pad(w1c, ((0, KPAD - K1), (0, 0))).astype(jnp.bfloat16)
    w2c = jnp.transpose(params["conv2_w"], (2, 3, 1, 0)).reshape(9, 128, 256).astype(jnp.bfloat16)

    # conv2 output geometry (3x3, stride 2, pad 1) and its block-diagonal tap selection.
    H2 = (H1 - 1) // 2 + 1
    W2 = (W1 - 1) // 2 + 1
    assert out_img_s == H2 == W2, "out_img_s must equal in_img_s // 4 for this module"
    n2 = H2 * W2
    sel_blk = _build_block_selection(_build_conv2_selection(H1, W1, H2, W2), bb)

    # BatchNorm(eval) folded to per-channel affine (f32).
    eps = 1e-5
    scale = (params["bn_gamma"] / jnp.sqrt(params["bn_var"] + eps)).reshape(1, 256)
    shift = (params["bn_beta"] - params["bn_mean"] * scale[0]).reshape(1, 256)

    # Head weight: PyTorch Flatten on NCHW is (c, h, w); kernel rows are (h, w) x 256 chans.
    fcw = params["fc_w"].reshape(256, n2).T                         # (n2, 256)
    fcb = params["fc_b"].reshape(1, 1)

    out = pl.pallas_call(
        _disc_fused_kernel,
        out_shape=jax.ShapeDtypeStruct((nb, bb, 128), jnp.float32),
        grid_spec=pltpu.PrefetchScalarGridSpec(
            num_scalar_prefetch=0,
            grid=(nb,),
            in_specs=[
                pl.BlockSpec((bb, n1, KPAD), lambda g: (g, 0, 0)),      # conv1 patches
                pl.BlockSpec((KPAD, 128), lambda g: (0, 0)),            # conv1 weight
                pl.BlockSpec((9 * bb * n2, bb * n1), lambda g: (0, 0)), # conv2 tap selection
                pl.BlockSpec((9, 128, 256), lambda g: (0, 0, 0)),       # conv2 weight taps
                pl.BlockSpec((1, 256), lambda g: (0, 0)),               # BN scale
                pl.BlockSpec((1, 256), lambda g: (0, 0)),               # BN shift
                pl.BlockSpec((n2, 256), lambda g: (0, 0)),              # head weight
                pl.BlockSpec((1, 1), lambda g: (0, 0)),                 # head bias
            ],
            out_specs=pl.BlockSpec((1, bb, 128), lambda g: (g, 0, 0)),
        ),
        compiler_params=pltpu.CompilerParams(
            dimension_semantics=("parallel",),
            vmem_limit_bytes=32 * 1024 * 1024,
        ),
    )(p1, w1c, sel_blk, w2c, scale, shift, fcw, fcb)

    return out.reshape(B_pad, 128)[:B, :1]                            # (B, 1)


if __name__ == "__main__":
    in_img_s, out_img_s, n_classes, greyscale = 16, 4, 8, False
    in_channels = 1 if greyscale else 3
    batch = 2

    key = jax.random.PRNGKey(0)
    kx, kl, kp = jax.random.split(key, 3)
    x = jax.random.normal(kx, (batch, in_channels, in_img_s, in_img_s), jnp.float32)
    labels = jax.random.randint(kl, (batch,), 0, n_classes)
    params = init_params(kp, in_img_s, out_img_s, n_classes, in_channels)

    out = conditional_discriminator_forward(params, x, labels, in_img_s, out_img_s,
                                            n_classes, 8)
    out = jax.block_until_ready(out)
    assert out.shape == (batch, 1), out.shape
    assert bool(jnp.all((out >= 0.0) & (out <= 1.0)))
    print("KERNEL_OK")
</pallas_src>

<mosaic_0001>
module attributes {stable_mosaic.version = 11 : i64} {
  func.func @_disc_fused_kernel(%arg0: i32, %arg1: memref<2x64x128xbf16, #tpu.memory_space<vmem>>, %arg2: memref<128x128xbf16, #tpu.memory_space<vmem>>, %arg3: memref<288x128xbf16, #tpu.memory_space<vmem>>, %arg4: memref<9x128x256xbf16, #tpu.memory_space<vmem>>, %arg5: memref<1x256xf32, #tpu.memory_space<vmem>>, %arg6: memref<1x256xf32, #tpu.memory_space<vmem>>, %arg7: memref<16x256xf32, #tpu.memory_space<vmem>>, %arg8: memref<1x1xf32, #tpu.memory_space<vmem>>, %arg9: memref<1x2x128xf32, #tpu.memory_space<vmem>>) attributes {dimension_semantics = [#tpu.dimension_semantics<parallel>], iteration_bounds = array<i64: 1>, scalar_prefetch = 0 : i64, scratch_operands = 0 : i64, tpu.core_type = #tpu.core_type<tc>, window_params = [{transform_indices = @transform_0, window_bounds = array<i64: 2, 64, 128>}, {pipeline_mode = #tpu.pipeline_mode<synchronous>, transform_indices = @transform_1, window_bounds = array<i64: 128, 128>}, {pipeline_mode = #tpu.pipeline_mode<synchronous>, transform_indices = @transform_2, window_bounds = array<i64: 288, 128>}, {pipeline_mode = #tpu.pipeline_mode<synchronous>, transform_indices = @transform_3, window_bounds = array<i64: 9, 128, 256>}, {pipeline_mode = #tpu.pipeline_mode<synchronous>, transform_indices = @transform_4, window_bounds = array<i64: 1, 256>}, {pipeline_mode = #tpu.pipeline_mode<synchronous>, transform_indices = @transform_5, window_bounds = array<i64: 1, 256>}, {pipeline_mode = #tpu.pipeline_mode<synchronous>, transform_indices = @transform_6, window_bounds = array<i64: 16, 256>}, {pipeline_mode = #tpu.pipeline_mode<synchronous>, transform_indices = @transform_7, window_bounds = array<i64: 1, 1>}, {transform_indices = @transform_8, window_bounds = array<i64: 1, 2, 128>}]} {
    %c0 = arith.constant 0 : index
    %c0_0 = arith.constant 0 : index
    %c0_1 = arith.constant 0 : index
    %0 = vector.load %arg1[%c0, %c0_0, %c0_1] : memref<2x64x128xbf16, #tpu.memory_space<vmem>>, vector<2x64x128xbf16>
    %1 = vector.shape_cast %0 : vector<2x64x128xbf16> to vector<128x128xbf16>
    %c0_2 = arith.constant 0 : index
    %c0_3 = arith.constant 0 : index
    %2 = vector.load %arg2[%c0_2, %c0_3] : memref<128x128xbf16, #tpu.memory_space<vmem>>, vector<128x128xbf16>
    %cst = arith.constant dense<0.000000e+00> : vector<128x128xf32>
    %3 = tpu.matmul %1, %2, %cst {dimension_numbers = #tpu.dot_dimension_numbers<[1], [0], [0], [1], [0, 0, 1, 1], [], []>} : vector<128x128xbf16>, vector<128x128xbf16>, vector<128x128xf32> -> vector<128x128xf32>
    %cst_4 = arith.constant 0.000000e+00 : f32
    %4 = vector.broadcast %cst_4 : f32 to vector<128x128xf32>
    %5 = arith.cmpf ogt, %3, %4 : vector<128x128xf32>
    %cst_5 = arith.constant 2.000000e-01 : f32
    %6 = vector.broadcast %cst_5 : f32 to vector<128x128xf32>
    %7 = arith.mulf %6, %3 : vector<128x128xf32>
    %8 = arith.select %5, %3, %7 : vector<128x128xi1>, vector<128x128xf32>
    %9 = arith.truncf %8 : vector<128x128xf32> to vector<128x128xbf16>
    %c0_6 = arith.constant 0 : index
    %c0_7 = arith.constant 0 : index
    %10 = vector.load %arg3[%c0_6, %c0_7] : memref<288x128xbf16, #tpu.memory_space<vmem>>, vector<288x128xbf16>
    %cst_8 = arith.constant dense<0.000000e+00> : vector<288x128xf32>
    %11 = tpu.matmul %10, %9, %cst_8 {dimension_numbers = #tpu.dot_dimension_numbers<[1], [0], [0], [1], [0, 0, 1, 1], [], []>} : vector<288x128xbf16>, vector<128x128xbf16>, vector<288x128xf32> -> vector<288x128xf32>
    %12 = arith.truncf %11 : vector<288x128xf32> to vector<288x128xbf16>
    %13 = vector.extract_strided_slice %12 {offsets = [0, 0], sizes = [32, 128], strides = [1, 1]} : vector<288x128xbf16> to vector<32x128xbf16>
    %c0_9 = arith.constant 0 : index
    %c0_10 = arith.constant 0 : index
    %c0_11 = arith.constant 0 : index
    %14 = vector.load %arg4[%c0_9, %c0_10, %c0_11] : memref<9x128x256xbf16, #tpu.memory_space<vmem>>, vector<1x128x256xbf16>
    %15 = vector.shape_cast %14 : vector<1x128x256xbf16> to vector<128x256xbf16>
    %cst_12 = arith.constant dense<0.000000e+00> : vector<32x256xf32>
    %16 = tpu.matmul %13, %15, %cst_12 {dimension_numbers = #tpu.dot_dimension_numbers<[1], [0], [0], [1], [0, 0, 1, 1], [], []>} : vector<32x128xbf16>, vector<128x256xbf16>, vector<32x256xf32> -> vector<32x256xf32>
    %17 = vector.extract_strided_slice %12 {offsets = [32, 0], sizes = [32, 128], strides = [1, 1]} : vector<288x128xbf16> to vector<32x128xbf16>
    %c1 = arith.constant 1 : index
    %c0_13 = arith.constant 0 : index
    %c0_14 = arith.constant 0 : index
    %18 = vector.load %arg4[%c1, %c0_13, %c0_14] : memref<9x128x256xbf16, #tpu.memory_space<vmem>>, vector<1x128x256xbf16>
    %19 = vector.shape_cast %18 : vector<1x128x256xbf16> to vector<128x256xbf16>
    %cst_15 = arith.constant dense<0.000000e+00> : vector<32x256xf32>
    %20 = tpu.matmul %17, %19, %cst_15 {dimension_numbers = #tpu.dot_dimension_numbers<[1], [0], [0], [1], [0, 0, 1, 1], [], []>} : vector<32x128xbf16>, vector<128x256xbf16>, vector<32x256xf32> -> vector<32x256xf32>
    %21 = arith.addf %16, %20 : vector<32x256xf32>
    %22 = vector.extract_strided_slice %12 {offsets = [64, 0], sizes = [32, 128], strides = [1, 1]} : vector<288x128xbf16> to vector<32x128xbf16>
    %c2 = arith.constant 2 : index
    %c0_16 = arith.constant 0 : index
    %c0_17 = arith.constant 0 : index
    %23 = vector.load %arg4[%c2, %c0_16, %c0_17] : memref<9x128x256xbf16, #tpu.memory_space<vmem>>, vector<1x128x256xbf16>
    %24 = vector.shape_cast %23 : vector<1x128x256xbf16> to vector<128x256xbf16>
    %cst_18 = arith.constant dense<0.000000e+00> : vector<32x256xf32>
    %25 = tpu.matmul %22, %24, %cst_18 {dimension_numbers = #tpu.dot_dimension_numbers<[1], [0], [0], [1], [0, 0, 1, 1], [], []>} : vector<32x128xbf16>, vector<128x256xbf16>, vector<32x256xf32> -> vector<32x256xf32>
    %26 = arith.addf %21, %25 : vector<32x256xf32>
    %27 = vector.extract_strided_slice %12 {offsets = [96, 0], sizes = [32, 128], strides = [1, 1]} : vector<288x128xbf16> to vector<32x128xbf16>
    %c3 = arith.constant 3 : index
    %c0_19 = arith.constant 0 : index
    %c0_20 = arith.constant 0 : index
    %28 = vector.load %arg4[%c3, %c0_19, %c0_20] : memref<9x128x256xbf16, #tpu.memory_space<vmem>>, vector<1x128x256xbf16>
    %29 = vector.shape_cast %28 : vector<1x128x256xbf16> to vector<128x256xbf16>
    %cst_21 = arith.constant dense<0.000000e+00> : vector<32x256xf32>
    %30 = tpu.matmul %27, %29, %cst_21 {dimension_numbers = #tpu.dot_dimension_numbers<[1], [0], [0], [1], [0, 0, 1, 1], [], []>} : vector<32x128xbf16>, vector<128x256xbf16>, vector<32x256xf32> -> vector<32x256xf32>
    %31 = arith.addf %26, %30 : vector<32x256xf32>
    %32 = vector.extract_strided_slice %12 {offsets = [128, 0], sizes = [32, 128], strides = [1, 1]} : vector<288x128xbf16> to vector<32x128xbf16>
    %c4 = arith.constant 4 : index
    %c0_22 = arith.constant 0 : index
    %c0_23 = arith.constant 0 : index
    %33 = vector.load %arg4[%c4, %c0_22, %c0_23] : memref<9x128x256xbf16, #tpu.memory_space<vmem>>, vector<1x128x256xbf16>
    %34 = vector.shape_cast %33 : vector<1x128x256xbf16> to vector<128x256xbf16>
    %cst_24 = arith.constant dense<0.000000e+00> : vector<32x256xf32>
    %35 = tpu.matmul %32, %34, %cst_24 {dimension_numbers = #tpu.dot_dimension_numbers<[1], [0], [0], [1], [0, 0, 1, 1], [], []>} : vector<32x128xbf16>, vector<128x256xbf16>, vector<32x256xf32> -> vector<32x256xf32>
    %36 = arith.addf %31, %35 : vector<32x256xf32>
    %37 = vector.extract_strided_slice %12 {offsets = [160, 0], sizes = [32, 128], strides = [1, 1]} : vector<288x128xbf16> to vector<32x128xbf16>
    %c5 = arith.constant 5 : index
    %c0_25 = arith.constant 0 : index
    %c0_26 = arith.constant 0 : index
    %38 = vector.load %arg4[%c5, %c0_25, %c0_26] : memref<9x128x256xbf16, #tpu.memory_space<vmem>>, vector<1x128x256xbf16>
    %39 = vector.shape_cast %38 : vector<1x128x256xbf16> to vector<128x256xbf16>
    %cst_27 = arith.constant dense<0.000000e+00> : vector<32x256xf32>
    %40 = tpu.matmul %37, %39, %cst_27 {dimension_numbers = #tpu.dot_dimension_numbers<[1], [0], [0], [1], [0, 0, 1, 1], [], []>} : vector<32x128xbf16>, vector<128x256xbf16>, vector<32x256xf32> -> vector<32x256xf32>
    %41 = arith.addf %36, %40 : vector<32x256xf32>
    %42 = vector.extract_strided_slice %12 {offsets = [192, 0], sizes = [32, 128], strides = [1, 1]} : vector<288x128xbf16> to vector<32x128xbf16>
    %c6 = arith.constant 6 : index
    %c0_28 = arith.constant 0 : index
    %c0_29 = arith.constant 0 : index
    %43 = vector.load %arg4[%c6, %c0_28, %c0_29] : memref<9x128x256xbf16, #tpu.memory_space<vmem>>, vector<1x128x256xbf16>
    %44 = vector.shape_cast %43 : vector<1x128x256xbf16> to vector<128x256xbf16>
    %cst_30 = arith.constant dense<0.000000e+00> : vector<32x256xf32>
    %45 = tpu.matmul %42, %44, %cst_30 {dimension_numbers = #tpu.dot_dimension_numbers<[1], [0], [0], [1], [0, 0, 1, 1], [], []>} : vector<32x128xbf16>, vector<128x256xbf16>, vector<32x256xf32> -> vector<32x256xf32>
    %46 = arith.addf %41, %45 : vector<32x256xf32>
    %47 = vector.extract_strided_slice %12 {offsets = [224, 0], sizes = [32, 128], strides = [1, 1]} : vector<288x128xbf16> to vector<32x128xbf16>
    %c7 = arith.constant 7 : index
    %c0_31 = arith.constant 0 : index
    %c0_32 = arith.constant 0 : index
    %48 = vector.load %arg4[%c7, %c0_31, %c0_32] : memref<9x128x256xbf16, #tpu.memory_space<vmem>>, vector<1x128x256xbf16>
    %49 = vector.shape_cast %48 : vector<1x128x256xbf16> to vector<128x256xbf16>
    %cst_33 = arith.constant dense<0.000000e+00> : vector<32x256xf32>
    %50 = tpu.matmul %47, %49, %cst_33 {dimension_numbers = #tpu.dot_dimension_numbers<[1], [0], [0], [1], [0, 0, 1, 1], [], []>} : vector<32x128xbf16>, vector<128x256xbf16>, vector<32x256xf32> -> vector<32x256xf32>
    %51 = arith.addf %46, %50 : vector<32x256xf32>
    %52 = vector.extract_strided_slice %12 {offsets = [256, 0], sizes = [32, 128], strides = [1, 1]} : vector<288x128xbf16> to vector<32x128xbf16>
    %c8 = arith.constant 8 : index
    %c0_34 = arith.constant 0 : index
    %c0_35 = arith.constant 0 : index
    %53 = vector.load %arg4[%c8, %c0_34, %c0_35] : memref<9x128x256xbf16, #tpu.memory_space<vmem>>, vector<1x128x256xbf16>
    %54 = vector.shape_cast %53 : vector<1x128x256xbf16> to vector<128x256xbf16>
    %cst_36 = arith.constant dense<0.000000e+00> : vector<32x256xf32>
    %55 = tpu.matmul %52, %54, %cst_36 {dimension_numbers = #tpu.dot_dimension_numbers<[1], [0], [0], [1], [0, 0, 1, 1], [], []>} : vector<32x128xbf16>, vector<128x256xbf16>, vector<32x256xf32> -> vector<32x256xf32>
    %56 = arith.addf %51, %55 : vector<32x256xf32>
    %c0_37 = arith.constant 0 : index
    %c0_38 = arith.constant 0 : index
    %57 = vector.load %arg5[%c0_37, %c0_38] : memref<1x256xf32, #tpu.memory_space<vmem>>, vector<1x256xf32>
    %58 = vector.broadcast %57 : vector<1x256xf32> to vector<32x256xf32>
    %59 = arith.mulf %56, %58 : vector<32x256xf32>
    %c0_39 = arith.constant 0 : index
    %c0_40 = arith.constant 0 : index
    %60 = vector.load %arg6[%c0_39, %c0_40] : memref<1x256xf32, #tpu.memory_space<vmem>>, vector<1x256xf32>
    %61 = vector.broadcast %60 : vector<1x256xf32> to vector<32x256xf32>
    %62 = arith.addf %59, %61 : vector<32x256xf32>
    %cst_41 = arith.constant 0.000000e+00 : f32
    %63 = vector.broadcast %cst_41 : f32 to vector<32x256xf32>
    %64 = arith.cmpf ogt, %62, %63 : vector<32x256xf32>
    %cst_42 = arith.constant 2.000000e-01 : f32
    %65 = vector.broadcast %cst_42 : f32 to vector<32x256xf32>
    %66 = arith.mulf %65, %62 : vector<32x256xf32>
    %67 = arith.select %64, %62, %66 : vector<32x256xi1>, vector<32x256xf32>
    %68 = vector.shape_cast %67 : vector<32x256xf32> to vector<2x16x256xf32>
    %c0_43 = arith.constant 0 : index
    %c0_44 = arith.constant 0 : index
    %69 = vector.load %arg7[%c0_43, %c0_44] : memref<16x256xf32, #tpu.memory_space<vmem>>, vector<16x256xf32>
    %70 = vector.shape_cast %69 : vector<16x256xf32> to vector<1x16x256xf32>
    %71 = vector.broadcast %70 : vector<1x16x256xf32> to vector<2x16x256xf32>
    %72 = arith.mulf %68, %71 : vector<2x16x256xf32>
    %cst_45 = arith.constant dense<0.000000e+00> : vector<2x16xf32>
    %73 = vector.multi_reduction <add>, %72, %cst_45 [2] : vector<2x16x256xf32> to vector<2x16xf32>
    %cst_46 = arith.constant dense<0.000000e+00> : vector<2xf32>
    %74 = vector.multi_reduction <add>, %73, %cst_46 [1] : vector<2x16xf32> to vector<2xf32>
    %75 = vector.shape_cast %74 : vector<2xf32> to vector<2x1xf32>
    %c0_47 = arith.constant 0 : index
    %c0_48 = arith.constant 0 : index
    %76 = vector.load %arg8[%c0_47, %c0_48] : memref<1x1xf32, #tpu.memory_space<vmem>>, vector<1x1xf32>
    %77 = vector.broadcast %76 : vector<1x1xf32> to vector<2x1xf32>
    %78 = arith.addf %75, %77 : vector<2x1xf32>
    %cst_49 = arith.constant 0.000000e+00 : f32
    %79 = vector.broadcast %cst_49 : f32 to vector<2x1xf32>
    %80 = arith.subf %79, %78 : vector<2x1xf32>
    %81 = math.exp %80 : vector<2x1xf32>
    %cst_50 = arith.constant 1.000000e+00 : f32
    %82 = vector.broadcast %cst_50 : f32 to vector<2x1xf32>
    %83 = arith.addf %82, %81 : vector<2x1xf32>
    %cst_51 = arith.constant 1.000000e+00 : f32
    %84 = vector.broadcast %cst_51 : f32 to vector<2x1xf32>
    %85 = arith.divf %84, %83 : vector<2x1xf32>
    %86 = vector.shape_cast %85 : vector<2x1xf32> to vector<2x1xf32>
    %87 = vector.broadcast %86 : vector<2x1xf32> to vector<2x128xf32>
    %c0_52 = arith.constant 0 : index
    %c0_53 = arith.constant 0 : index
    %c0_54 = arith.constant 0 : index
    %88 = vector.load %arg9[%c0_52, %c0_53, %c0_54] : memref<1x2x128xf32, #tpu.memory_space<vmem>>, vector<1x2x128xf32>
    %89 = vector.shape_cast %88 : vector<1x2x128xf32> to vector<2x128xf32>
    %90 = vector.shape_cast %87 : vector<2x128xf32> to vector<1x2x128xf32>
    tpu.vector_store %arg9[%c0_52, %c0_53, %c0_54], %90 {strides = array<i32>} : memref<1x2x128xf32, #tpu.memory_space<vmem>>, vector<1x2x128xf32>,
    return
  }
  func.func @transform_0(%arg0: i32) -> (i32, i32, i32) {
    %c0_i32 = arith.constant 0 : i32
    %c0_i32_0 = arith.constant 0 : i32
    %c0_i32_1 = arith.constant 0 : i32
    return %arg0, %c0_i32, %c0_i32_0 : i32, i32, i32
  }
  func.func @transform_1(%arg0: i32) -> (i32, i32) {
    %c0_i32 = arith.constant 0 : i32
    %c0_i32_0 = arith.constant 0 : i32
    %c0_i32_1 = arith.constant 0 : i32
    return %c0_i32, %c0_i32_0 : i32, i32
  }
  func.func @transform_2(%arg0: i32) -> (i32, i32) {
    %c0_i32 = arith.constant 0 : i32
    %c0_i32_0 = arith.constant 0 : i32
    %c0_i32_1 = arith.constant 0 : i32
    return %c0_i32, %c0_i32_0 : i32, i32
  }
  func.func @transform_3(%arg0: i32) -> (i32, i32, i32) {
    %c0_i32 = arith.constant 0 : i32
    %c0_i32_0 = arith.constant 0 : i32
    %c0_i32_1 = arith.constant 0 : i32
    %c0_i32_2 = arith.constant 0 : i32
    return %c0_i32, %c0_i32_0, %c0_i32_1 : i32, i32, i32
  }
  func.func @transform_4(%arg0: i32) -> (i32, i32) {
    %c0_i32 = arith.constant 0 : i32
    %c0_i32_0 = arith.constant 0 : i32
    %c0_i32_1 = arith.constant 0 : i32
    return %c0_i32, %c0_i32_0 : i32, i32
  }
  func.func @transform_5(%arg0: i32) -> (i32, i32) {
    %c0_i32 = arith.constant 0 : i32
    %c0_i32_0 = arith.constant 0 : i32
    %c0_i32_1 = arith.constant 0 : i32
    return %c0_i32, %c0_i32_0 : i32, i32
  }
  func.func @transform_6(%arg0: i32) -> (i32, i32) {
    %c0_i32 = arith.constant 0 : i32
    %c0_i32_0 = arith.constant 0 : i32
    %c0_i32_1 = arith.constant 0 : i32
    return %c0_i32, %c0_i32_0 : i32, i32
  }
  func.func @transform_7(%arg0: i32) -> (i32, i32) {
    %c0_i32 = arith.constant 0 : i32
    %c0_i32_0 = arith.constant 0 : i32
    %c0_i32_1 = arith.constant 0 : i32
    return %c0_i32, %c0_i32_0 : i32, i32
  }
  func.func @transform_8(%arg0: i32) -> (i32, i32, i32) {
    %c0_i32 = arith.constant 0 : i32
    %c0_i32_0 = arith.constant 0 : i32
    %c0_i32_1 = arith.constant 0 : i32
    return %arg0, %c0_i32, %c0_i32_0 : i32, i32, i32
  }
}

</mosaic_0001>

<llo_original>
// kernel: conditional_discriminator_forward.1
$region0: #{conditional_discriminator_forward.1}
  #allocation0 [shape = 'u32[]', space=smem, size = 0x4, offset = 0x4, fixed_abs, tag = 'smem constant byte address 0x4 - core index']
  #allocation1 [shape = 'u32[144,128]{1,0:T(1,128)}', space=vmem, size = 0x12000, scoped, tag = 'internal scratch']
  #allocation2 [shape = 'f32[1,1]{1,0:T(1,128)S(1)}', space=vmem, size = 0x200, scoped, tag = 'scoped memory for conditional_discriminator_forward.1']
  %s0 = inlined_call_operand.vmem [shape: bf16[2,64,128], index: 0, kind: input, shape index: {}]
  %s1 = inlined_call_operand.vmem [shape: bf16[128,128], index: 1, kind: input, shape index: {}]
  %s2 = inlined_call_operand.vmem [shape: bf16[288,128], index: 2, kind: input, shape index: {}]
  %s3 = inlined_call_operand.vmem [shape: bf16[9,128,256], index: 3, kind: input, shape index: {}]
  %s4 = inlined_call_operand.vmem [shape: f32[1,256], index: 4, kind: input, shape index: {}]
  %s5 = inlined_call_operand.vmem [shape: f32[1,256], index: 5, kind: input, shape index: {}]
  %s6 = inlined_call_operand.vmem [shape: f32[16,256], index: 6, kind: input, shape index: {}]
  %s7 = inlined_call_operand.<no memory space> [shape: f32[1,1], index: 7, kind: input, shape index: {}]
  %s8 = inlined_call_operand.vmem [shape: f32[1,2,128], index: 8, kind: output, shape index: {}]
  %s9 = sld [smem:[#allocation0]]
  $region42: #{conditional_discriminator_forward.1} parent=0
    _
  %s11 = ssub.s32 1, %s9
  %s12 = scalar_select 0, %s11, %s9
  %v13 = vstv %s7
  %14 = vst [vmem:[#allocation2] sm:$0x1] %v13
  // Predicated region
  $region2: #{conditional_discriminator_forward.1} parent=0 // pred_check
    _
  $region3: #{conditional_discriminator_forward.1} parent=0 // pred_check_branch
    %16 = sbr.rel (0) target = $region5
  $region4: #{conditional_discriminator_forward.1} parent=0 // pred_region
    _
  $region5: #{conditional_discriminator_forward.1} parent=0 // pred_fallthru
    _
  // Predicated region
  $region6: #{conditional_discriminator_forward.1} parent=0 // pred_check
    _
  $region7: #{conditional_discriminator_forward.1} parent=0 // pred_check_branch
    %18 = sbr.rel (0) target = $region9
  $region8: #{conditional_discriminator_forward.1} parent=0 // pred_region
    _
  $region9: #{conditional_discriminator_forward.1} parent=0 // pred_fallthru
    _
  // Predicated region
  $region10: #{conditional_discriminator_forward.1} parent=0 // pred_check
    _
  $region11: #{conditional_discriminator_forward.1} parent=0 // pred_check_branch
    %20 = sbr.rel (0) target = $region13
  $region12: #{conditional_discriminator_forward.1} parent=0 // pred_region
    _
  $region13: #{conditional_discriminator_forward.1} parent=0 // pred_fallthru
    _
  // Predicated region
  $region14: #{conditional_discriminator_forward.1} parent=0 // pred_check
    _
  $region15: #{conditional_discriminator_forward.1} parent=0 // pred_check_branch
    %22 = sbr.rel (0) target = $region17
  $region16: #{conditional_discriminator_forward.1} parent=0 // pred_region
    _
  $region17: #{conditional_discriminator_forward.1} parent=0 // pred_fallthru
    _
  // Predicated region
  $region18: #{conditional_discriminator_forward.1} parent=0 // pred_check
    _
  $region19: #{conditional_discriminator_forward.1} parent=0 // pred_check_branch
    %24 = sbr.rel (0) target = $region21
  $region20: #{conditional_discriminator_forward.1} parent=0 // pred_region
    _
  $region21: #{conditional_discriminator_forward.1} parent=0 // pred_fallthru
    _
  // Predicated region
  $region22: #{conditional_discriminator_forward.1} parent=0 // pred_check
    _
  $region23: #{conditional_discriminator_forward.1} parent=0 // pred_check_branch
    %26 = sbr.rel (0) target = $region25
  $region24: #{conditional_discriminator_forward.1} parent=0 // pred_region
    _
  $region25: #{conditional_discriminator_forward.1} parent=0 // pred_fallthru
    _
  // Predicated region
  $region26: #{conditional_discriminator_forward.1} parent=0 // pred_check
    _
  $region27: #{conditional_discriminator_forward.1} parent=0 // pred_check_branch
    %28 = sbr.rel (0) target = $region29
  $region28: #{conditional_discriminator_forward.1} parent=0 // pred_region
    _
  $region29: #{conditional_discriminator_forward.1} parent=0 // pred_fallthru
    _
  // Predicated region
  $region30: #{conditional_discriminator_forward.1} parent=0 // pred_check
    _
  $region31: #{conditional_discriminator_forward.1} parent=0 // pred_check_branch
    %30 = sbr.rel (0) target = $region33
  $region32: #{conditional_discriminator_forward.1} parent=0 // pred_region
    _
  $region33: #{conditional_discriminator_forward.1} parent=0 // pred_fallthru
    _
  %v32 = vld [vmem:[%s0] sm:$0xf]
  %v33 = vld [vmem:[%s0 + $0x4] sm:$0xf]
  %v34 = vld [vmem:[%s0 + $0x8] sm:$0xf]
  %v35 = vld [vmem:[%s0 + $0xc] sm:$0xf]
  %v36 = vld [vmem:[%s0 + $0x10] sm:$0xf]
  %v37 = vld [vmem:[%s0 + $0x14] sm:$0xf]
  %v38 = vld [vmem:[%s0 + $0x18] sm:$0xf]
  %v39 = vld [vmem:[%s0 + $0x1c] sm:$0xf]
  %v40 = vld [vmem:[%s0 + $0x20] sm:$0xf]
  %v41 = vld [vmem:[%s0 + $0x24] sm:$0xf]
  %v42 = vld [vmem:[%s0 + $0x28] sm:$0xf]
  %v43 = vld [vmem:[%s0 + $0x2c] sm:$0xf]
  %v44 = vld [vmem:[%s0 + $0x30] sm:$0xf]
  %v45 = vld [vmem:[%s0 + $0x34] sm:$0xf]
  %v46 = vld [vmem:[%s0 + $0x38] sm:$0xf]
  %v47 = vld [vmem:[%s0 + $0x3c] sm:$0xf]
  %v48 = vld [vmem:[%s1] sm:$0xf]
  %v49 = vld [vmem:[%s1 + $0x4] sm:$0xf]
  %v50 = vld [vmem:[%s1 + $0x8] sm:$0xf]
  %v51 = vld [vmem:[%s1 + $0xc] sm:$0xf]
  %v52 = vld [vmem:[%s1 + $0x10] sm:$0xf]
  %v53 = vld [vmem:[%s1 + $0x14] sm:$0xf]
  %v54 = vld [vmem:[%s1 + $0x18] sm:$0xf]
  %v55 = vld [vmem:[%s1 + $0x1c] sm:$0xf]
  %v56 = vld [vmem:[%s1 + $0x20] sm:$0xf]
  %v57 = vld [vmem:[%s1 + $0x24] sm:$0xf]
  %v58 = vld [vmem:[%s1 + $0x28] sm:$0xf]
  %v59 = vld [vmem:[%s1 + $0x2c] sm:$0xf]
  %v60 = vld [vmem:[%s1 + $0x30] sm:$0xf]
  %v61 = vld [vmem:[%s1 + $0x34] sm:$0xf]
  %v62 = vld [vmem:[%s1 + $0x38] sm:$0xf]
  %v63 = vld [vmem:[%s1 + $0x3c] sm:$0xf]
  %v80 = vunpack.c.l.b16 %v32
  %v81 = vunpack.c.l.b16 %v33
  %v82 = vunpack.c.l.b16 %v34
  %v83 = vunpack.c.l.b16 %v35
  %v84 = vunpack.c.l.b16 %v36
  %v85 = vunpack.c.l.b16 %v37
  %v86 = vunpack.c.l.b16 %v38
  %v87 = vunpack.c.l.b16 %v39
  %v88 = vunpack.c.l.b16 %v40
  %v89 = vunpack.c.l.b16 %v41
  %v90 = vunpack.c.l.b16 %v42
  %v91 = vunpack.c.l.b16 %v43
  %v92 = vunpack.c.l.b16 %v44
  %v93 = vunpack.c.l.b16 %v45
  %v94 = vunpack.c.l.b16 %v46
  %v95 = vunpack.c.l.b16 %v47
  %v96 = vpack.c.b16 %v81, %v80
  %v97 = vpack.c.b16 %v83, %v82
  %v98 = vpack.c.b16 %v85, %v84
  %v99 = vpack.c.b16 %v87, %v86
  %v100 = vpack.c.b16 %v89, %v88
  %v101 = vpack.c.b16 %v91, %v90
  %v102 = vpack.c.b16 %v93, %v92
  %v103 = vpack.c.b16 %v95, %v94
  %v128 = vunpack.c.l.b16 %v48
  %v129 = vunpack.c.l.b16 %v49
  %v130 = vunpack.c.l.b16 %v50
  %v131 = vunpack.c.l.b16 %v51
  %v132 = vunpack.c.l.b16 %v52
  %v133 = vunpack.c.l.b16 %v53
  %v134 = vunpack.c.l.b16 %v54
  %v135 = vunpack.c.l.b16 %v55
  %v136 = vunpack.c.l.b16 %v56
  %v137 = vunpack.c.l.b16 %v57
  %v138 = vunpack.c.l.b16 %v58
  %v139 = vunpack.c.l.b16 %v59
  %v140 = vunpack.c.l.b16 %v60
  %v141 = vunpack.c.l.b16 %v61
  %v142 = vunpack.c.l.b16 %v62
  %v143 = vunpack.c.l.b16 %v63
  %v144 = vpack.c.b16 %v129, %v128
  %v145 = vpack.c.b16 %v131, %v130
  %v146 = vpack.c.b16 %v133, %v132
  %v147 = vpack.c.b16 %v135, %v134
  %v148 = vpack.c.b16 %v137, %v136
  %v149 = vpack.c.b16 %v139, %v138
  %v150 = vpack.c.b16 %v141, %v140
  %v151 = vpack.c.b16 %v143, %v142
  %160 = vmatprep.subr.bf16.mxu0 0
  %161 = vmatpush1.bf16.msra.mxu0 %v151
  %162 = vmatprep.subr.bf16.mxu0 0
  %163 = vmatpush1.bf16.msra.mxu0 %v150
  %164 = vmatprep.subr.bf16.mxu0 0
  %165 = vmatpush1.bf16.msra.mxu0 %v149
  %166 = vmatprep.subr.bf16.mxu0 0
  %167 = vmatpush1.bf16.msra.mxu0 %v148
  %168 = vmatprep.subr.bf16.mxu0 0
  %169 = vmatpush1.bf16.msra.mxu0 %v147
  %170 = vmatprep.subr.bf16.mxu0 0
  %171 = vmatpush1.bf16.msra.mxu0 %v146
  %172 = vmatprep.subr.bf16.mxu0 0
  %173 = vmatpush1.bf16.msra.mxu0 %v145
  %174 = vmatprep.subr.bf16.mxu0 0
  %175 = vmatpush1.bf16.msra.mxu0 %v144
  %176 = vmatprep.subr.bf16.mxu0 0
  %177 = vmatpush2.bf16.msra.mxu0 0
  %178 = vmatprep.subr.bf16.mxu0 0
  %179 = vmatpush2.bf16.msra.mxu0 0
  %180 = vmatprep.subr.bf16.mxu0 0
  %181 = vmatpush2.bf16.msra.mxu0 0
  %182 = vmatprep.subr.bf16.mxu0 0
  %183 = vmatpush2.bf16.msra.mxu0 0
  %184 = vmatprep.subr.bf16.mxu0 0
  %185 = vmatpush2.bf16.msra.mxu0 0
  %186 = vmatprep.subr.bf16.mxu0 0
  %187 = vmatpush2.bf16.msra.mxu0 0
  %188 = vmatprep.subr.bf16.mxu0 0
  %189 = vmatpush2.bf16.msra.mxu0 0
  %190 = vmatprep.subr.bf16.mxu0 0
  %191 = vmatpush2.bf16.msra.mxu0 0
  %192 = vmatprep.mubr.bf16.mxu0 0
  %193 = vmatmul.mubr.bf16.gmra.mxu0 %v96
  %v194 = vpop.f32.mrf.mxu0
  %v195 = vadd.f32 0.0, %v194
  %v196 = vpop.f32.mrf.mxu0
  %v197 = vpop.f32.mrf.mxu0
  %v198 = vadd.f32 0.0, %v197
  %v199 = vpop.f32.mrf.mxu0
  %200 = vmatprep.mubr.bf16.mxu0 0
  %201 = vmatmul.mubr.bf16.gmra.mxu0 %v97
  %v202 = vpop.f32.mrf.mxu0
  %v203 = vadd.f32 0.0, %v202
  %v204 = vpop.f32.mrf.mxu0
  %v205 = vpop.f32.mrf.mxu0
  %v206 = vadd.f32 0.0, %v205
  %v207 = vpop.f32.mrf.mxu0
  %208 = vmatprep.mubr.bf16.mxu0 0
  %209 = vmatmul.mubr.bf16.gmra.mxu0 %v98
  %v210 = vpop.f32.mrf.mxu0
  %v211 = vadd.f32 0.0, %v210
  %v212 = vpop.f32.mrf.mxu0
  %v213 = vpop.f32.mrf.mxu0
  %v214 = vadd.f32 0.0, %v213
  %v215 = vpop.f32.mrf.mxu0
  %216 = vmatprep.mubr.bf16.mxu0 0
  %217 = vmatmul.mubr.bf16.gmra.mxu0 %v99
  %v218 = vpop.f32.mrf.mxu0
  %v219 = vadd.f32 0.0, %v218
  %v220 = vpop.f32.mrf.mxu0
  %v221 = vpop.f32.mrf.mxu0
  %v222 = vadd.f32 0.0, %v221
  %v223 = vpop.f32.mrf.mxu0
  %224 = vmatprep.mubr.bf16.mxu0 0
  %225 = vmatmul.mubr.bf16.gmra.mxu0 %v100
  %v226 = vpop.f32.mrf.mxu0
  %v227 = vadd.f32 0.0, %v226
  %v228 = vpop.f32.mrf.mxu0
  %v229 = vpop.f32.mrf.mxu0
  %v230 = vadd.f32 0.0, %v229
  %v231 = vpop.f32.mrf.mxu0
  %232 = vmatprep.mubr.bf16.mxu0 0
  %233 = vmatmul.mubr.bf16.gmra.mxu0 %v101
  %v234 = vpop.f32.mrf.mxu0
  %v235 = vadd.f32 0.0, %v234
  %v236 = vpop.f32.mrf.mxu0
  %v237 = vpop.f32.mrf.mxu0
  %v238 = vadd.f32 0.0, %v237
  %v239 = vpop.f32.mrf.mxu0
  %240 = vmatprep.mubr.bf16.mxu0 0
  %241 = vmatmul.mubr.bf16.gmra.mxu0 %v102
  %v242 = vpop.f32.mrf.mxu0
  %v243 = vadd.f32 0.0, %v242
  %v244 = vpop.f32.mrf.mxu0
  %v245 = vpop.f32.mrf.mxu0
  %v246 = vadd.f32 0.0, %v245
  %v247 = vpop.f32.mrf.mxu0
  %248 = vmatprep.mubr.bf16.mxu0 0
  %249 = vmatmul.mubr.bf16.gmra.mxu0 %v103
  %v250 = vpop.f32.mrf.mxu0
  %v251 = vadd.f32 0.0, %v250
  %v252 = vpop.f32.mrf.mxu0
  %v253 = vpop.f32.mrf.mxu0
  %v254 = vadd.f32 0.0, %v253
  %v255 = vpop.f32.mrf.mxu0
  %256 = vdwg.mxu0
  %vm257 = vcmp.gt.f32.partialorder %v195, 0.0
  %vm258 = vcmp.gt.f32.partialorder %v198, 0.0
  %vm259 = vcmp.gt.f32.partialorder %v203, 0.0
  %vm260 = vcmp.gt.f32.partialorder %v206, 0.0
  %vm261 = vcmp.gt.f32.partialorder %v211, 0.0
  %vm262 = vcmp.gt.f32.partialorder %v214, 0.0
  %vm263 = vcmp.gt.f32.partialorder %v219, 0.0
  %vm264 = vcmp.gt.f32.partialorder %v222, 0.0
  %vm265 = vcmp.gt.f32.partialorder %v227, 0.0
  %vm266 = vcmp.gt.f32.partialorder %v230, 0.0
  %vm267 = vcmp.gt.f32.partialorder %v235, 0.0
  %vm268 = vcmp.gt.f32.partialorder %v238, 0.0
  %vm269 = vcmp.gt.f32.partialorder %v243, 0.0
  %vm270 = vcmp.gt.f32.partialorder %v246, 0.0
  %vm271 = vcmp.gt.f32.partialorder %v251, 0.0
  %vm272 = vcmp.gt.f32.partialorder %v254, 0.0
  %v273 = vmul.f32 %v195, 0.2
  %v274 = vmul.f32 %v198, 0.2
  %v275 = vmul.f32 %v203, 0.2
  %v276 = vmul.f32 %v206, 0.2
  %v277 = vmul.f32 %v211, 0.2
  %v278 = vmul.f32 %v214, 0.2
  %v279 = vmul.f32 %v219, 0.2
  %v280 = vmul.f32 %v222, 0.2
  %v281 = vmul.f32 %v227, 0.2
  %v282 = vmul.f32 %v230, 0.2
  %v283 = vmul.f32 %v235, 0.2
  %v284 = vmul.f32 %v238, 0.2
  %v285 = vmul.f32 %v243, 0.2
  %v286 = vmul.f32 %v246, 0.2
  %v287 = vmul.f32 %v251, 0.2
  %v288 = vmul.f32 %v254, 0.2
  %v289 = vsel %vm257, %v195, %v273
  %v290 = vsel %vm258, %v198, %v274
  %v291 = vsel %vm259, %v203, %v275
  %v292 = vsel %vm260, %v206, %v276
  %v293 = vsel %vm261, %v211, %v277
  %v294 = vsel %vm262, %v214, %v278
  %v295 = vsel %vm263, %v219, %v279
  %v296 = vsel %vm264, %v222, %v280
  %v297 = vsel %vm265, %v227, %v281
  %v298 = vsel %vm266, %v230, %v282
  %v299 = vsel %vm267, %v235, %v283
  %v300 = vsel %vm268, %v238, %v284
  %v301 = vsel %vm269, %v243, %v285
  %v302 = vsel %vm270, %v246, %v286
  %v303 = vsel %vm271, %v251, %v287
  %v304 = vsel %vm272, %v254, %v288
  %v305 = vpack.c.bf16 %v290, %v289
  %v306 = vpack.c.bf16 %v292, %v291
  %v307 = vpack.c.bf16 %v294, %v293
  %v308 = vpack.c.bf16 %v296, %v295
  %v309 = vpack.c.bf16 %v298, %v297
  %v310 = vpack.c.bf16 %v300, %v299
  %v311 = vpack.c.bf16 %v302, %v301
  %v312 = vpack.c.bf16 %v304, %v303
  %v313 = vld [vmem:[%s2] sm:$0xf]
  %v314 = vld [vmem:[%s2 + $0x4] sm:$0xf]
  %v315 = vld [vmem:[%s2 + $0x8] sm:$0xf]
  %v316 = vld [vmem:[%s2 + $0xc] sm:$0xf]
  %v317 = vld [vmem:[%s2 + $0x10] sm:$0xf]
  %v318 = vld [vmem:[%s2 + $0x14] sm:$0xf]
  %v319 = vld [vmem:[%s2 + $0x18] sm:$0xf]
  %v320 = vld [vmem:[%s2 + $0x1c] sm:$0xf]
  %v321 = vld [vmem:[%s2 + $0x20] sm:$0xf]
  %v322 = vld [vmem:[%s2 + $0x24] sm:$0xf]
  %v323 = vld [vmem:[%s2 + $0x28] sm:$0xf]
  %v324 = vld [vmem:[%s2 + $0x2c] sm:$0xf]
  %v325 = vld [vmem:[%s2 + $0x30] sm:$0xf]
  %v326 = vld [vmem:[%s2 + $0x34] sm:$0xf]
  %v327 = vld [vmem:[%s2 + $0x38] sm:$0xf]
  %v328 = vld [vmem:[%s2 + $0x3c] sm:$0xf]
  %v329 = vld [vmem:[%s2 + $0x40] sm:$0xf]
  %v330 = vld [vmem:[%s2 + $0x44] sm:$0xf]
  %v331 = vld [vmem:[%s2 + $0x48] sm:$0xf]
  %v332 = vld [vmem:[%s2 + $0x4c] sm:$0xf]
  %v333 = vld [vmem:[%s2 + $0x50] sm:$0xf]
  %v334 = vld [vmem:[%s2 + $0x54] sm:$0xf]
  %v335 = vld [vmem:[%s2 + $0x58] sm:$0xf]
  %v336 = vld [vmem:[%s2 + $0x5c] sm:$0xf]
  %v337 = vld [vmem:[%s2 + $0x60] sm:$0xf]
  %v338 = vld [vmem:[%s2 + $0x64] sm:$0xf]
  %v339 = vld [vmem:[%s2 + $0x68] sm:$0xf]
  %v340 = vld [vmem:[%s2 + $0x6c] sm:$0xf]
  %v341 = vld [vmem:[%s2 + $0x70] sm:$0xf]
  %v342 = vld [vmem:[%s2 + $0x74] sm:$0xf]
  %v343 = vld [vmem:[%s2 + $0x78] sm:$0xf]
  %v344 = vld [vmem:[%s2 + $0x7c] sm:$0xf]
  %v345 = vld [vmem:[%s2 + $0x80] sm:$0xf]
  %v346 = vld [vmem:[%s2 + $0x84] sm:$0xf]
  %v347 = vld [vmem:[%s2 + $0x88] sm:$0xf]
  %v348 = vld [vmem:[%s2 + $0x8c] sm:$0xf]
  %v385 = vunpack.c.l.b16 %v313
  %v386 = vunpack.c.l.b16 %v314
  %v387 = vunpack.c.l.b16 %v315
  %v388 = vunpack.c.l.b16 %v316
  %v389 = vunpack.c.l.b16 %v317
  %v390 = vunpack.c.l.b16 %v318
  %v391 = vunpack.c.l.b16 %v319
  %v392 = vunpack.c.l.b16 %v320
  %v393 = vunpack.c.l.b16 %v321
  %v394 = vunpack.c.l.b16 %v322
  %v395 = vunpack.c.l.b16 %v323
  %v396 = vunpack.c.l.b16 %v324
  %v397 = vunpack.c.l.b16 %v325
  %v398 = vunpack.c.l.b16 %v326
  %v399 = vunpack.c.l.b16 %v327
  %v400 = vunpack.c.l.b16 %v328
  %v401 = vunpack.c.l.b16 %v329
  %v402 = vunpack.c.l.b16 %v330
  %v403 = vunpack.c.l.b16 %v331
  %v404 = vunpack.c.l.b16 %v332
  %v405 = vunpack.c.l.b16 %v333
  %v406 = vunpack.c.l.b16 %v334
  %v407 = vunpack.c.l.b16 %v335
  %v408 = vunpack.c.l.b16 %v336
  %v409 = vunpack.c.l.b16 %v337
  %v410 = vunpack.c.l.b16 %v338
  %v411 = vunpack.c.l.b16 %v339
  %v412 = vunpack.c.l.b16 %v340
  %v413 = vunpack.c.l.b16 %v341
  %v414 = vunpack.c.l.b16 %v342
  %v415 = vunpack.c.l.b16 %v343
  %v416 = vunpack.c.l.b16 %v344
  %v417 = vunpack.c.l.b16 %v345
  %v418 = vunpack.c.l.b16 %v346
  %v419 = vunpack.c.l.b16 %v347
  %v420 = vunpack.c.l.b16 %v348
  %v421 = vpack.c.b16 %v386, %v385
  %v422 = vpack.c.b16 %v388, %v387
  %v423 = vpack.c.b16 %v390, %v389
  %v424 = vpack.c.b16 %v392, %v391
  %v425 = vpack.c.b16 %v394, %v393
  %v426 = vpack.c.b16 %v396, %v395
  %v427 = vpack.c.b16 %v398, %v397
  %v428 = vpack.c.b16 %v400, %v399
  %v429 = vpack.c.b16 %v402, %v401
  %v430 = vpack.c.b16 %v404, %v403
  %v431 = vpack.c.b16 %v406, %v405
  %v432 = vpack.c.b16 %v408, %v407
  %v433 = vpack.c.b16 %v410, %v409
  %v434 = vpack.c.b16 %v412, %v411
  %v435 = vpack.c.b16 %v414, %v413
  %v436 = vpack.c.b16 %v416, %v415
  %v437 = vpack.c.b16 %v418, %v417
  %v438 = vpack.c.b16 %v420, %v419
  %457 = vmatprep.subr.bf16.mxu0 0
  %458 = vmatpush1.bf16.msra.mxu0 %v312
  %459 = vmatprep.subr.bf16.mxu0 0
  %460 = vmatpush1.bf16.msra.mxu0 %v311
  %461 = vmatprep.subr.bf16.mxu0 0
  %462 = vmatpush1.bf16.msra.mxu0 %v310
  %463 = vmatprep.subr.bf16.mxu0 0
  %464 = vmatpush1.bf16.msra.mxu0 %v309
  %465 = vmatprep.subr.bf16.mxu0 0
  %466 = vmatpush1.bf16.msra.mxu0 %v308
  %467 = vmatprep.subr.bf16.mxu0 0
  %468 = vmatpush1.bf16.msra.mxu0 %v307
  %469 = vmatprep.subr.bf16.mxu0 0
  %470 = vmatpush1.bf16.msra.mxu0 %v306
  %471 = vmatprep.subr.bf16.mxu0 0
  %472 = vmatpush1.bf16.msra.mxu0 %v305
  %473 = vmatprep.subr.bf16.mxu0 0
  %474 = vmatpush2.bf16.msra.mxu0 0
  %475 = vmatprep.subr.bf16.mxu0 0
  %476 = vmatpush2.bf16.msra.mxu0 0
  %477 = vmatprep.subr.bf16.mxu0 0
  %478 = vmatpush2.bf16.msra.mxu0 0
  %479 = vmatprep.subr.bf16.mxu0 0
  %480 = vmatpush2.bf16.msra.mxu0 0
  %481 = vmatprep.subr.bf16.mxu0 0
  %482 = vmatpush2.bf16.msra.mxu0 0
  %483 = vmatprep.subr.bf16.mxu0 0
  %484 = vmatpush2.bf16.msra.mxu0 0
  %485 = vmatprep.subr.bf16.mxu0 0
  %486 = vmatpush2.bf16.msra.mxu0 0
  %487 = vmatprep.subr.bf16.mxu0 0
  %488 = vmatpush2.bf16.msra.mxu0 0
  %489 = vmatprep.mubr.bf16.mxu0 0
  %490 = vmatmul.mubr.bf16.gmra.mxu0 %v421
  %v491 = vpop.f32.mrf.mxu0
  %v492 = vadd.f32 0.0, %v491
  %v493 = vpop.f32.mrf.mxu0
  %v494 = vpop.f32.mrf.mxu0
  %v495 = vadd.f32 0.0, %v494
  %v496 = vpop.f32.mrf.mxu0
  %497 = vmatprep.mubr.bf16.mxu0 0
  %498 = vmatmul.mubr.bf16.gmra.mxu0 %v422
  %v499 = vpop.f32.mrf.mxu0
  %v500 = vadd.f32 0.0, %v499
  %v501 = vpop.f32.mrf.mxu0
  %v502 = vpop.f32.mrf.mxu0
  %v503 = vadd.f32 0.0, %v502
  %v504 = vpop.f32.mrf.mxu0
  %505 = vmatprep.mubr.bf16.mxu0 0
  %506 = vmatmul.mubr.bf16.gmra.mxu0 %v423
  %v507 = vpop.f32.mrf.mxu0
  %v508 = vadd.f32 0.0, %v507
  %v509 = vpop.f32.mrf.mxu0
  %v510 = vpop.f32.mrf.mxu0
  %v511 = vadd.f32 0.0, %v510
  %v512 = vpop.f32.mrf.mxu0
  %513 = vmatprep.mubr.bf16.mxu0 0
  %514 = vmatmul.mubr.bf16.gmra.mxu0 %v424
  %v515 = vpop.f32.mrf.mxu0
  %v516 = vadd.f32 0.0, %v515
  %v517 = vpop.f32.mrf.mxu0
  %v518 = vpop.f32.mrf.mxu0
  %v519 = vadd.f32 0.0, %v518
  %v520 = vpop.f32.mrf.mxu0
  %521 = vmatprep.mubr.bf16.mxu0 0
  %522 = vmatmul.mubr.bf16.gmra.mxu0 %v425
  %v523 = vpop.f32.mrf.mxu0
  %v524 = vadd.f32 0.0, %v523
  %v525 = vpop.f32.mrf.mxu0
  %v526 = vpop.f32.mrf.mxu0
  %v527 = vadd.f32 0.0, %v526
  %v528 = vpop.f32.mrf.mxu0
  %529 = vmatprep.mubr.bf16.mxu0 0
  %530 = vmatmul.mubr.bf16.gmra.mxu0 %v426
  %v531 = vpop.f32.mrf.mxu0
  %v532 = vadd.f32 0.0, %v531
  %v533 = vpop.f32.mrf.mxu0
  %v534 = vpop.f32.mrf.mxu0
  %v535 = vadd.f32 0.0, %v534
  %v536 = vpop.f32.mrf.mxu0
  %537 = vmatprep.mubr.bf16.mxu0 0
  %538 = vmatmul.mubr.bf16.gmra.mxu0 %v427
  %v539 = vpop.f32.mrf.mxu0
  %v540 = vadd.f32 0.0, %v539
  %v541 = vpop.f32.mrf.mxu0
  %v542 = vpop.f32.mrf.mxu0
  %v543 = vadd.f32 0.0, %v542
  %v544 = vpop.f32.mrf.mxu0
  %545 = vmatprep.mubr.bf16.mxu0 0
  %546 = vmatmul.mubr.bf16.gmra.mxu0 %v428
  %v547 = vpop.f32.mrf.mxu0
  %v548 = vadd.f32 0.0, %v547
  %v549 = vpop.f32.mrf.mxu0
  %v550 = vpop.f32.mrf.mxu0
  %v551 = vadd.f32 0.0, %v550
  %v552 = vpop.f32.mrf.mxu0
  %553 = vmatprep.mubr.bf16.mxu0 0
  %554 = vmatmul.mubr.bf16.gmra.mxu0 %v429
  %v555 = vpop.f32.mrf.mxu0
  %v556 = vadd.f32 0.0, %v555
  %v557 = vpop.f32.mrf.mxu0
  %v558 = vpop.f32.mrf.mxu0
  %v559 = vadd.f32 0.0, %v558
  %v560 = vpop.f32.mrf.mxu0
  %561 = vmatprep.mubr.bf16.mxu0 0
  %562 = vmatmul.mubr.bf16.gmra.mxu0 %v430
  %v563 = vpop.f32.mrf.mxu0
  %v564 = vadd.f32 0.0, %v563
  %v565 = vpop.f32.mrf.mxu0
  %v566 = vpop.f32.mrf.mxu0
  %v567 = vadd.f32 0.0, %v566
  %v568 = vpop.f32.mrf.mxu0
  %569 = vmatprep.mubr.bf16.mxu0 0
  %570 = vmatmul.mubr.bf16.gmra.mxu0 %v431
  %v571 = vpop.f32.mrf.mxu0
  %v572 = vadd.f32 0.0, %v571
  %v573 = vpop.f32.mrf.mxu0
  %v574 = vpop.f32.mrf.mxu0
  %v575 = vadd.f32 0.0, %v574
  %v576 = vpop.f32.mrf.mxu0
  %577 = vmatprep.mubr.bf16.mxu0 0
  %578 = vmatmul.mubr.bf16.gmra.mxu0 %v432
  %v579 = vpop.f32.mrf.mxu0
  %v580 = vadd.f32 0.0, %v579
  %v581 = vpop.f32.mrf.mxu0
  %v582 = vpop.f32.mrf.mxu0
  %v583 = vadd.f32 0.0, %v582
  %v584 = vpop.f32.mrf.mxu0
  %585 = vmatprep.mubr.bf16.mxu0 0
  %586 = vmatmul.mubr.bf16.gmra.mxu0 %v433
  %v587 = vpop.f32.mrf.mxu0
  %v588 = vadd.f32 0.0, %v587
  %v589 = vpop.f32.mrf.mxu0
  %v590 = vpop.f32.mrf.mxu0
  %v591 = vadd.f32 0.0, %v590
  %v592 = vpop.f32.mrf.mxu0
  %593 = vmatprep.mubr.bf16.mxu0 0
  %594 = vmatmul.mubr.bf16.gmra.mxu0 %v434
  %v595 = vpop.f32.mrf.mxu0
  %v596 = vadd.f32 0.0, %v595
  %v597 = vpop.f32.mrf.mxu0
  %v598 = vpop.f32.mrf.mxu0
  %v599 = vadd.f32 0.0, %v598
  %v600 = vpop.f32.mrf.mxu0
  %601 = vmatprep.mubr.bf16.mxu0 0
  %602 = vmatmul.mubr.bf16.gmra.mxu0 %v435
  %v603 = vpop.f32.mrf.mxu0
  %v604 = vadd.f32 0.0, %v603
  %v605 = vpop.f32.mrf.mxu0
  %v606 = vpop.f32.mrf.mxu0
  %v607 = vadd.f32 0.0, %v606
  %v608 = vpop.f32.mrf.mxu0
  %609 = vmatprep.mubr.bf16.mxu0 0
  %610 = vmatmul.mubr.bf16.gmra.mxu0 %v436
  %v611 = vpop.f32.mrf.mxu0
  %v612 = vadd.f32 0.0, %v611
  %v613 = vpop.f32.mrf.mxu0
  %v614 = vpop.f32.mrf.mxu0
  %v615 = vadd.f32 0.0, %v614
  %v616 = vpop.f32.mrf.mxu0
  %617 = vmatprep.mubr.bf16.mxu0 0
  %618 = vmatmul.mubr.bf16.gmra.mxu0 %v437
  %v619 = vpop.f32.mrf.mxu0
  %v620 = vadd.f32 0.0, %v619
  %v621 = vpop.f32.mrf.mxu0
  %v622 = vpop.f32.mrf.mxu0
  %v623 = vadd.f32 0.0, %v622
  %v624 = vpop.f32.mrf.mxu0
  %625 = vmatprep.mubr.bf16.mxu0 0
  %626 = vmatmul.mubr.bf16.gmra.mxu0 %v438
  %v627 = vpop.f32.mrf.mxu0
  %v628 = vadd.f32 0.0, %v627
  %v629 = vpop.f32.mrf.mxu0
  %v630 = vpop.f32.mrf.mxu0
  %v631 = vadd.f32 0.0, %v630
  %v632 = vpop.f32.mrf.mxu0
  %633 = vdwg.mxu0
  %v634 = vpack.c.bf16 %v495, %v492
  %v635 = vpack.c.bf16 %v503, %v500
  %v636 = vpack.c.bf16 %v511, %v508
  %v637 = vpack.c.bf16 %v519, %v516
  %v638 = vpack.c.bf16 %v527, %v524
  %v639 = vpack.c.bf16 %v535, %v532
  %v640 = vpack.c.bf16 %v543, %v540
  %v641 = vpack.c.bf16 %v551, %v548
  %v642 = vpack.c.bf16 %v559, %v556
  %v643 = vpack.c.bf16 %v567, %v564
  %v644 = vpack.c.bf16 %v575, %v572
  %v645 = vpack.c.bf16 %v583, %v580
  %v646 = vpack.c.bf16 %v591, %v588
  %v647 = vpack.c.bf16 %v599, %v596
  %v648 = vpack.c.bf16 %v607, %v604
  %v649 = vpack.c.bf16 %v615, %v612
  %v650 = vpack.c.bf16 %v623, %v620
  %v651 = vpack.c.bf16 %v631, %v628
  %v652 = vld [vmem:[%s3] sm:$0xff]
  %v653 = vld [vmem:[%s3 + $0x8] sm:$0xff]
  %v654 = vld [vmem:[%s3 + $0x10] sm:$0xff]
  %v655 = vld [vmem:[%s3 + $0x18] sm:$0xff]
  %v656 = vld [vmem:[%s3 + $0x20] sm:$0xff]
  %v657 = vld [vmem:[%s3 + $0x28] sm:$0xff]
  %v658 = vld [vmem:[%s3 + $0x30] sm:$0xff]
  %v659 = vld [vmem:[%s3 + $0x38] sm:$0xff]
  %v660 = vld [vmem:[%s3 + $0x40] sm:$0xff]
  %v661 = vld [vmem:[%s3 + $0x48] sm:$0xff]
  %v662 = vld [vmem:[%s3 + $0x50] sm:$0xff]
  %v663 = vld [vmem:[%s3 + $0x58] sm:$0xff]
  %v664 = vld [vmem:[%s3 + $0x60] sm:$0xff]
  %v665 = vld [vmem:[%s3 + $0x68] sm:$0xff]
  %v666 = vld [vmem:[%s3 + $0x70] sm:$0xff]
  %v667 = vld [vmem:[%s3 + $0x78] sm:$0xff]
  %s668 = scalar_lea.vmem %s3, 128
  %v669 = vld [vmem:[%s668] sm:$0xff]
  %v670 = vld [vmem:[%s668 + $0x8] sm:$0xff]
  %v671 = vld [vmem:[%s668 + $0x10] sm:$0xff]
  %v672 = vld [vmem:[%s668 + $0x18] sm:$0xff]
  %v673 = vld [vmem:[%s668 + $0x20] sm:$0xff]
  %v674 = vld [vmem:[%s668 + $0x28] sm:$0xff]
  %v675 = vld [vmem:[%s668 + $0x30] sm:$0xff]
  %v676 = vld [vmem:[%s668 + $0x38] sm:$0xff]
  %v677 = vld [vmem:[%s668 + $0x40] sm:$0xff]
  %v678 = vld [vmem:[%s668 + $0x48] sm:$0xff]
  %v679 = vld [vmem:[%s668 + $0x50] sm:$0xff]
  %v680 = vld [vmem:[%s668 + $0x58] sm:$0xff]
  %v681 = vld [vmem:[%s668 + $0x60] sm:$0xff]
  %v682 = vld [vmem:[%s668 + $0x68] sm:$0xff]
  %v683 = vld [vmem:[%s668 + $0x70] sm:$0xff]
  %v684 = vld [vmem:[%s668 + $0x78] sm:$0xff]
  %v701 = vunpack.c.l.b16 %v669
  %v702 = vunpack.c.h.b16 %v669
  %v703 = vunpack.c.l.b16 %v670
  %v704 = vunpack.c.h.b16 %v670
  %v705 = vunpack.c.l.b16 %v671
  %v706 = vunpack.c.h.b16 %v671
  %v707 = vunpack.c.l.b16 %v672
  %v708 = vunpack.c.h.b16 %v672
  %v709 = vunpack.c.l.b16 %v673
  %v710 = vunpack.c.h.b16 %v673
  %v711 = vunpack.c.l.b16 %v674
  %v712 = vunpack.c.h.b16 %v674
  %v713 = vunpack.c.l.b16 %v675
  %v714 = vunpack.c.h.b16 %v675
  %v715 = vunpack.c.l.b16 %v676
  %v716 = vunpack.c.h.b16 %v676
  %v717 = vunpack.c.l.b16 %v677
  %v718 = vunpack.c.h.b16 %v677
  %v719 = vunpack.c.l.b16 %v678
  %v720 = vunpack.c.h.b16 %v678
  %v721 = vunpack.c.l.b16 %v679
  %v722 = vunpack.c.h.b16 %v679
  %v723 = vunpack.c.l.b16 %v680
  %v724 = vunpack.c.h.b16 %v680
  %v725 = vunpack.c.l.b16 %v681
  %v726 = vunpack.c.h.b16 %v681
  %v727 = vunpack.c.l.b16 %v682
  %v728 = vunpack.c.h.b16 %v682
  %v729 = vunpack.c.l.b16 %v683
  %v730 = vunpack.c.h.b16 %v683
  %v731 = vunpack.c.l.b16 %v684
  %v732 = vunpack.c.h.b16 %v684
  %v733 = vpack.c.b16 %v703, %v701
  %v734 = vpack.c.b16 %v704, %v702
  %v735 = vpack.c.b16 %v707, %v705
  %v736 = vpack.c.b16 %v708, %v706
  %v737 = vpack.c.b16 %v711, %v709
  %v738 = vpack.c.b16 %v712, %v710
  %v739 = vpack.c.b16 %v715, %v713
  %v740 = vpack.c.b16 %v716, %v714
  %v741 = vpack.c.b16 %v719, %v717
  %v742 = vpack.c.b16 %v720, %v718
  %v743 = vpack.c.b16 %v723, %v721
  %v744 = vpack.c.b16 %v724, %v722
  %v745 = vpack.c.b16 %v727, %v725
  %v746 = vpack.c.b16 %v728, %v726
  %v747 = vpack.c.b16 %v731, %v729
  %v748 = vpack.c.b16 %v732, %v730
  %765 = vmatprep.subr.bf16.mxu0 %v748
  %766 = vmatpush1.bf16.msra.mxu0 %v747
  %767 = vmatprep.subr.bf16.mxu0 %v746
  %768 = vmatpush1.bf16.msra.mxu0 %v745
  %769 = vmatprep.subr.bf16.mxu0 %v744
  %770 = vmatpush1.bf16.msra.mxu0 %v743
  %771 = vmatprep.subr.bf16.mxu0 %v742
  %772 = vmatpush1.bf16.msra.mxu0 %v741
  %773 = vmatprep.subr.bf16.mxu0 %v740
  %774 = vmatpush1.bf16.msra.mxu0 %v739
  %775 = vmatprep.subr.bf16.mxu0 %v738
  %776 = vmatpush1.bf16.msra.mxu0 %v737
  %777 = vmatprep.subr.bf16.mxu0 %v736
  %778 = vmatpush1.bf16.msra.mxu0 %v735
  %779 = vmatprep.subr.bf16.mxu0 %v734
  %780 = vmatpush1.bf16.msra.mxu0 %v733
  %781 = vmatprep.subr.bf16.mxu0 0
  %782 = vmatpush2.bf16.msra.mxu0 0
  %783 = vmatprep.subr.bf16.mxu0 0
  %784 = vmatpush2.bf16.msra.mxu0 0
  %785 = vmatprep.subr.bf16.mxu0 0
  %786 = vmatpush2.bf16.msra.mxu0 0
  %787 = vmatprep.subr.bf16.mxu0 0
  %788 = vmatpush2.bf16.msra.mxu0 0
  %789 = vmatprep.subr.bf16.mxu0 0
  %790 = vmatpush2.bf16.msra.mxu0 0
  %791 = vmatprep.subr.bf16.mxu0 0
  %792 = vmatpush2.bf16.msra.mxu0 0
  %793 = vmatprep.subr.bf16.mxu0 0
  %794 = vmatpush2.bf16.msra.mxu0 0
  %795 = vmatprep.subr.bf16.mxu0 0
  %796 = vmatpush2.bf16.msra.mxu0 0
  %797 = vmatprep.mubr.bf16.mxu0 0
  %798 = vmatmul.mubr.bf16.gmra.mxu0 %v636
  %v799 = vpop.f32.mrf.mxu0
  %v800 = vadd.f32 0.0, %v799
  %v801 = vpop.f32.mrf.mxu0
  %v802 = vadd.f32 0.0, %v801
  %v803 = vpop.f32.mrf.mxu0
  %v804 = vadd.f32 0.0, %v803
  %v805 = vpop.f32.mrf.mxu0
  %v806 = vadd.f32 0.0, %v805
  %807 = vmatprep.mubr.bf16.mxu0 0
  %808 = vmatmul.mubr.bf16.gmra.mxu0 %v637
  %v809 = vpop.f32.mrf.mxu0
  %v810 = vadd.f32 0.0, %v809
  %v811 = vpop.f32.mrf.mxu0
  %v812 = vadd.f32 0.0, %v811
  %v813 = vpop.f32.mrf.mxu0
  %v814 = vadd.f32 0.0, %v813
  %v815 = vpop.f32.mrf.mxu0
  %v816 = vadd.f32 0.0, %v815
  %817 = vdwg.mxu0
  %v834 = vunpack.c.l.b16 %v652
  %v835 = vunpack.c.h.b16 %v652
  %v836 = vunpack.c.l.b16 %v653
  %v837 = vunpack.c.h.b16 %v653
  %v838 = vunpack.c.l.b16 %v654
  %v839 = vunpack.c.h.b16 %v654
  %v840 = vunpack.c.l.b16 %v655
  %v841 = vunpack.c.h.b16 %v655
  %v842 = vunpack.c.l.b16 %v656
  %v843 = vunpack.c.h.b16 %v656
  %v844 = vunpack.c.l.b16 %v657
  %v845 = vunpack.c.h.b16 %v657
  %v846 = vunpack.c.l.b16 %v658
  %v847 = vunpack.c.h.b16 %v658
  %v848 = vunpack.c.l.b16 %v659
  %v849 = vunpack.c.h.b16 %v659
  %v850 = vunpack.c.l.b16 %v660
  %v851 = vunpack.c.h.b16 %v660
  %v852 = vunpack.c.l.b16 %v661
  %v853 = vunpack.c.h.b16 %v661
  %v854 = vunpack.c.l.b16 %v662
  %v855 = vunpack.c.h.b16 %v662
  %v856 = vunpack.c.l.b16 %v663
  %v857 = vunpack.c.h.b16 %v663
  %v858 = vunpack.c.l.b16 %v664
  %v859 = vunpack.c.h.b16 %v664
  %v860 = vunpack.c.l.b16 %v665
  %v861 = vunpack.c.h.b16 %v665
  %v862 = vunpack.c.l.b16 %v666
  %v863 = vunpack.c.h.b16 %v666
  %v864 = vunpack.c.l.b16 %v667
  %v865 = vunpack.c.h.b16 %v667
  %v866 = vpack.c.b16 %v836, %v834
  %v867 = vpack.c.b16 %v837, %v835
  %v868 = vpack.c.b16 %v840, %v838
  %v869 = vpack.c.b16 %v841, %v839
  %v870 = vpack.c.b16 %v844, %v842
  %v871 = vpack.c.b16 %v845, %v843
  %v872 = vpack.c.b16 %v848, %v846
  %v873 = vpack.c.b16 %v849, %v847
  %v874 = vpack.c.b16 %v852, %v850
  %v875 = vpack.c.b16 %v853, %v851
  %v876 = vpack.c.b16 %v856, %v854
  %v877 = vpack.c.b16 %v857, %v855
  %v878 = vpack.c.b16 %v860, %v858
  %v879 = vpack.c.b16 %v861, %v859
  %v880 = vpack.c.b16 %v864, %v862
  %v881 = vpack.c.b16 %v865, %v863
  %898 = vmatprep.subr.bf16.mxu0 %v881
  %899 = vmatpush1.bf16.msra.mxu0 %v880
  %900 = vmatprep.subr.bf16.mxu0 %v879
  %901 = vmatpush1.bf16.msra.mxu0 %v878
  %902 = vmatprep.subr.bf16.mxu0 %v877
  %903 = vmatpush1.bf16.msra.mxu0 %v876
  %904 = vmatprep.subr.bf16.mxu0 %v875
  %905 = vmatpush1.bf16.msra.mxu0 %v874
  %906 = vmatprep.subr.bf16.mxu0 %v873
  %907 = vmatpush1.bf16.msra.mxu0 %v872
  %908 = vmatprep.subr.bf16.mxu0 %v871
  %909 = vmatpush1.bf16.msra.mxu0 %v870
  %910 = vmatprep.subr.bf16.mxu0 %v869
  %911 = vmatpush1.bf16.msra.mxu0 %v868
  %912 = vmatprep.subr.bf16.mxu0 %v867
  %913 = vmatpush1.bf16.msra.mxu0 %v866
  %914 = vmatprep.subr.bf16.mxu0 0
  %915 = vmatpush2.bf16.msra.mxu0 0
  %916 = vmatprep.subr.bf16.mxu0 0
  %917 = vmatpush2.bf16.msra.mxu0 0
  %918 = vmatprep.subr.bf16.mxu0 0
  %919 = vmatpush2.bf16.msra.mxu0 0
  %920 = vmatprep.subr.bf16.mxu0 0
  %921 = vmatpush2.bf16.msra.mxu0 0
  %922 = vmatprep.subr.bf16.mxu0 0
  %923 = vmatpush2.bf16.msra.mxu0 0
  %924 = vmatprep.subr.bf16.mxu0 0
  %925 = vmatpush2.bf16.msra.mxu0 0
  %926 = vmatprep.subr.bf16.mxu0 0
  %927 = vmatpush2.bf16.msra.mxu0 0
  %928 = vmatprep.subr.bf16.mxu0 0
  %929 = vmatpush2.bf16.msra.mxu0 0
  %930 = vmatprep.mubr.bf16.mxu0 0
  %931 = vmatmul.mubr.bf16.gmra.mxu0 %v634
  %v932 = vpop.f32.mrf.mxu0
  %v933 = vadd.f32 %v800, %v932
  %v934 = vpop.f32.mrf.mxu0
  %v935 = vadd.f32 %v802, %v934
  %v936 = vpop.f32.mrf.mxu0
  %v937 = vadd.f32 %v804, %v936
  %v938 = vpop.f32.mrf.mxu0
  %v939 = vadd.f32 %v806, %v938
  %940 = vmatprep.mubr.bf16.mxu0 0
  %941 = vmatmul.mubr.bf16.gmra.mxu0 %v635
  %v942 = vpop.f32.mrf.mxu0
  %v943 = vadd.f32 %v810, %v942
  %v944 = vpop.f32.mrf.mxu0
  %v945 = vadd.f32 %v812, %v944
  %v946 = vpop.f32.mrf.mxu0
  %v947 = vadd.f32 %v814, %v946
  %v948 = vpop.f32.mrf.mxu0
  %v949 = vadd.f32 %v816, %v948
  %950 = vdwg.mxu0
  %s951 = scalar_lea.vmem %s3, 256
  %v952 = vld [vmem:[%s951] sm:$0xff]
  %v953 = vld [vmem:[%s951 + $0x8] sm:$0xff]
  %v954 = vld [vmem:[%s951 + $0x10] sm:$0xff]
  %v955 = vld [vmem:[%s951 + $0x18] sm:$0xff]
  %v956 = vld [vmem:[%s951 + $0x20] sm:$0xff]
  %v957 = vld [vmem:[%s951 + $0x28] sm:$0xff]
  %v958 = vld [vmem:[%s951 + $0x30] sm:$0xff]
  %v959 = vld [vmem:[%s951 + $0x38] sm:$0xff]
  %v960 = vld [vmem:[%s951 + $0x40] sm:$0xff]
  %v961 = vld [vmem:[%s951 + $0x48] sm:$0xff]
  %v962 = vld [vmem:[%s951 + $0x50] sm:$0xff]
  %v963 = vld [vmem:[%s951 + $0x58] sm:$0xff]
  %v964 = vld [vmem:[%s951 + $0x60] sm:$0xff]
  %v965 = vld [vmem:[%s951 + $0x68] sm:$0xff]
  %v966 = vld [vmem:[%s951 + $0x70] sm:$0xff]
  %v967 = vld [vmem:[%s951 + $0x78] sm:$0xff]
  %v984 = vunpack.c.l.b16 %v952
  %v985 = vunpack.c.h.b16 %v952
  %v986 = vunpack.c.l.b16 %v953
  %v987 = vunpack.c.h.b16 %v953
  %v988 = vunpack.c.l.b16 %v954
  %v989 = vunpack.c.h.b16 %v954
  %v990 = vunpack.c.l.b16 %v955
  %v991 = vunpack.c.h.b16 %v955
  %v992 = vunpack.c.l.b16 %v956
  %v993 = vunpack.c.h.b16 %v956
  %v994 = vunpack.c.l.b16 %v957
  %v995 = vunpack.c.h.b16 %v957
  %v996 = vunpack.c.l.b16 %v958
  %v997 = vunpack.c.h.b16 %v958
  %v998 = vunpack.c.l.b16 %v959
  %v999 = vunpack.c.h.b16 %v959
  %v1000 = vunpack.c.l.b16 %v960
  %v1001 = vunpack.c.h.b16 %v960
  %v1002 = vunpack.c.l.b16 %v961
  %v1003 = vunpack.c.h.b16 %v961
  %v1004 = vunpack.c.l.b16 %v962
  %v1005 = vunpack.c.h.b16 %v962
  %v1006 = vunpack.c.l.b16 %v963
  %v1007 = vunpack.c.h.b16 %v963
  %v1008 = vunpack.c.l.b16 %v964
  %v1009 = vunpack.c.h.b16 %v964
  %v1010 = vunpack.c.l.b16 %v965
  %v1011 = vunpack.c.h.b16 %v965
  %v1012 = vunpack.c.l.b16 %v966
  %v1013 = vunpack.c.h.b16 %v966
  %v1014 = vunpack.c.l.b16 %v967
  %v1015 = vunpack.c.h.b16 %v967
  %v1016 = vpack.c.b16 %v986, %v984
  %v1017 = vpack.c.b16 %v987, %v985
  %v1018 = vpack.c.b16 %v990, %v988
  %v1019 = vpack.c.b16 %v991, %v989
  %v1020 = vpack.c.b16 %v994, %v992
  %v1021 = vpack.c.b16 %v995, %v993
  %v1022 = vpack.c.b16 %v998, %v996
  %v1023 = vpack.c.b16 %v999, %v997
  %v1024 = vpack.c.b16 %v1002, %v1000
  %v1025 = vpack.c.b16 %v1003, %v1001
  %v1026 = vpack.c.b16 %v1006, %v1004
  %v1027 = vpack.c.b16 %v1007, %v1005
  %v1028 = vpack.c.b16 %v1010, %v1008
  %v1029 = vpack.c.b16 %v1011, %v1009
  %v1030 = vpack.c.b16 %v1014, %v1012
  %v1031 = vpack.c.b16 %v1015, %v1013
  %1048 = vmatprep.subr.bf16.mxu0 %v1031
  %1049 = vmatpush1.bf16.msra.mxu0 %v1030
  %1050 = vmatprep.subr.bf16.mxu0 %v1029
  %1051 = vmatpush1.bf16.msra.mxu0 %v1028
  %1052 = vmatprep.subr.bf16.mxu0 %v1027
  %1053 = vmatpush1.bf16.msra.mxu0 %v1026
  %1054 = vmatprep.subr.bf16.mxu0 %v1025
  %1055 = vmatpush1.bf16.msra.mxu0 %v1024
  %1056 = vmatprep.subr.bf16.mxu0 %v1023
  %1057 = vmatpush1.bf16.msra.mxu0 %v1022
  %1058 = vmatprep.subr.bf16.mxu0 %v1021
  %1059 = vmatpush1.bf16.msra.mxu0 %v1020
  %1060 = vmatprep.subr.bf16.mxu0 %v1019
  %1061 = vmatpush1.bf16.msra.mxu0 %v1018
  %1062 = vmatprep.subr.bf16.mxu0 %v1017
  %1063 = vmatpush1.bf16.msra.mxu0 %v1016
  %1064 = vmatprep.subr.bf16.mxu0 0
  %1065 = vmatpush2.bf16.msra.mxu0 0
  %1066 = vmatprep.subr.bf16.mxu0 0
  %1067 = vmatpush2.bf16.msra.mxu0 0
  %1068 = vmatprep.subr.bf16.mxu0 0
  %1069 = vmatpush2.bf16.msra.mxu0 0
  %1070 = vmatprep.subr.bf16.mxu0 0
  %1071 = vmatpush2.bf16.msra.mxu0 0
  %1072 = vmatprep.subr.bf16.mxu0 0
  %1073 = vmatpush2.bf16.msra.mxu0 0
  %1074 = vmatprep.subr.bf16.mxu0 0
  %1075 = vmatpush2.bf16.msra.mxu0 0
  %1076 = vmatprep.subr.bf16.mxu0 0
  %1077 = vmatpush2.bf16.msra.mxu0 0
  %1078 = vmatprep.subr.bf16.mxu0 0
  %1079 = vmatpush2.bf16.msra.mxu0 0
  %1080 = vmatprep.mubr.bf16.mxu0 0
  %1081 = vmatmul.mubr.bf16.gmra.mxu0 %v638
  %v1082 = vpop.f32.mrf.mxu0
  %v1083 = vadd.f32 0.0, %v1082
  %v1084 = vpop.f32.mrf.mxu0
  %v1085 = vadd.f32 0.0, %v1084
  %v1086 = vpop.f32.mrf.mxu0
  %v1087 = vadd.f32 0.0, %v1086
  %v1088 = vpop.f32.mrf.mxu0
  %v1089 = vadd.f32 0.0, %v1088
  %1090 = vmatprep.mubr.bf16.mxu0 0
  %1091 = vmatmul.mubr.bf16.gmra.mxu0 %v639
  %v1092 = vpop.f32.mrf.mxu0
  %v1093 = vadd.f32 0.0, %v1092
  %v1094 = vpop.f32.mrf.mxu0
  %v1095 = vadd.f32 0.0, %v1094
  %v1096 = vpop.f32.mrf.mxu0
  %v1097 = vadd.f32 0.0, %v1096
  %v1098 = vpop.f32.mrf.mxu0
  %v1099 = vadd.f32 0.0, %v1098
  %1100 = vdwg.mxu0
  %v1101 = vadd.f32 %v933, %v1083
  %v1102 = vadd.f32 %v935, %v1085
  %v1103 = vadd.f32 %v937, %v1087
  %v1104 = vadd.f32 %v939, %v1089
  %v1105 = vadd.f32 %v943, %v1093
  %v1106 = vadd.f32 %v945, %v1095
  %v1107 = vadd.f32 %v947, %v1097
  %v1108 = vadd.f32 %v949, %v1099
  %s1109 = scalar_lea.vmem %s3, 384
  %v1110 = vld [vmem:[%s1109] sm:$0xff]
  %v1111 = vld [vmem:[%s1109 + $0x8] sm:$0xff]
  %v1112 = vld [vmem:[%s1109 + $0x10] sm:$0xff]
  %v1113 = vld [vmem:[%s1109 + $0x18] sm:$0xff]
  %v1114 = vld [vmem:[%s1109 + $0x20] sm:$0xff]
  %v1115 = vld [vmem:[%s1109 + $0x28] sm:$0xff]
  %v1116 = vld [vmem:[%s1109 + $0x30] sm:$0xff]
  %v1117 = vld [vmem:[%s1109 + $0x38] sm:$0xff]
  %v1118 = vld [vmem:[%s1109 + $0x40] sm:$0xff]
  %v1119 = vld [vmem:[%s1109 + $0x48] sm:$0xff]
  %v1120 = vld [vmem:[%s1109 + $0x50] sm:$0xff]
  %v1121 = vld [vmem:[%s1109 + $0x58] sm:$0xff]
  %v1122 = vld [vmem:[%s1109 + $0x60] sm:$0xff]
  %v1123 = vld [vmem:[%s1109 + $0x68] sm:$0xff]
  %v1124 = vld [vmem:[%s1109 + $0x70] sm:$0xff]
  %v1125 = vld [vmem:[%s1109 + $0x78] sm:$0xff]
  %v1142 = vunpack.c.l.b16 %v1110
  %v1143 = vunpack.c.h.b16 %v1110
  %v1144 = vunpack.c.l.b16 %v1111
  %v1145 = vunpack.c.h.b16 %v1111
  %v1146 = vunpack.c.l.b16 %v1112
  %v1147 = vunpack.c.h.b16 %v1112
  %v1148 = vunpack.c.l.b16 %v1113
  %v1149 = vunpack.c.h.b16 %v1113
  %v1150 = vunpack.c.l.b16 %v1114
  %v1151 = vunpack.c.h.b16 %v1114
  %v1152 = vunpack.c.l.b16 %v1115
  %v1153 = vunpack.c.h.b16 %v1115
  %v1154 = vunpack.c.l.b16 %v1116
  %v1155 = vunpack.c.h.b16 %v1116
  %v1156 = vunpack.c.l.b16 %v1117
  %v1157 = vunpack.c.h.b16 %v1117
  %v1158 = vunpack.c.l.b16 %v1118
  %v1159 = vunpack.c.h.b16 %v1118
  %v1160 = vunpack.c.l.b16 %v1119
  %v1161 = vunpack.c.h.b16 %v1119
  %v1162 = vunpack.c.l.b16 %v1120
  %v1163 = vunpack.c.h.b16 %v1120
  %v1164 = vunpack.c.l.b16 %v1121
  %v1165 = vunpack.c.h.b16 %v1121
  %v1166 = vunpack.c.l.b16 %v1122
  %v1167 = vunpack.c.h.b16 %v1122
  %v1168 = vunpack.c.l.b16 %v1123
  %v1169 = vunpack.c.h.b16 %v1123
  %v1170 = vunpack.c.l.b16 %v1124
  %v1171 = vunpack.c.h.b16 %v1124
  %v1172 = vunpack.c.l.b16 %v1125
  %v1173 = vunpack.c.h.b16 %v1125
  %v1174 = vpack.c.b16 %v1144, %v1142
  %v1175 = vpack.c.b16 %v1145, %v1143
  %v1176 = vpack.c.b16 %v1148, %v1146
  %v1177 = vpack.c.b16 %v1149, %v1147
  %v1178 = vpack.c.b16 %v1152, %v1150
  %v1179 = vpack.c.b16 %v1153, %v1151
  %v1180 = vpack.c.b16 %v1156, %v1154
  %v1181 = vpack.c.b16 %v1157, %v1155
  %v1182 = vpack.c.b16 %v1160, %v1158
  %v1183 = vpack.c.b16 %v1161, %v1159
  %v1184 = vpack.c.b16 %v1164, %v1162
  %v1185 = vpack.c.b16 %v1165, %v1163
  %v1186 = vpack.c.b16 %v1168, %v1166
  %v1187 = vpack.c.b16 %v1169, %v1167
  %v1188 = vpack.c.b16 %v1172, %v1170
  %v1189 = vpack.c.b16 %v1173, %v1171
  %1206 = vmatprep.subr.bf16.mxu0 %v1189
  %1207 = vmatpush1.bf16.msra.mxu0 %v1188
  %1208 = vmatprep.subr.bf16.mxu0 %v1187
  %1209 = vmatpush1.bf16.msra.mxu0 %v1186
  %1210 = vmatprep.subr.bf16.mxu0 %v1185
  %1211 = vmatpush1.bf16.msra.mxu0 %v1184
  %1212 = vmatprep.subr.bf16.mxu0 %v1183
  %1213 = vmatpush1.bf16.msra.mxu0 %v1182
  %1214 = vmatprep.subr.bf16.mxu0 %v1181
  %1215 = vmatpush1.bf16.msra.mxu0 %v1180
  %1216 = vmatprep.subr.bf16.mxu0 %v1179
  %1217 = vmatpush1.bf16.msra.mxu0 %v1178
  %1218 = vmatprep.subr.bf16.mxu0 %v1177
  %1219 = vmatpush1.bf16.msra.mxu0 %v1176
  %1220 = vmatprep.subr.bf16.mxu0 %v1175
  %1221 = vmatpush1.bf16.msra.mxu0 %v1174
  %1222 = vmatprep.subr.bf16.mxu0 0
  %1223 = vmatpush2.bf16.msra.mxu0 0
  %1224 = vmatprep.subr.bf16.mxu0 0
  %1225 = vmatpush2.bf16.msra.mxu0 0
  %1226 = vmatprep.subr.bf16.mxu0 0
  %1227 = vmatpush2.bf16.msra.mxu0 0
  %1228 = vmatprep.subr.bf16.mxu0 0
  %1229 = vmatpush2.bf16.msra.mxu0 0
  %1230 = vmatprep.subr.bf16.mxu0 0
  %1231 = vmatpush2.bf16.msra.mxu0 0
  %1232 = vmatprep.subr.bf16.mxu0 0
  %1233 = vmatpush2.bf16.msra.mxu0 0
  %1234 = vmatprep.subr.bf16.mxu0 0
  %1235 = vmatpush2.bf16.msra.mxu0 0
  %1236 = vmatprep.subr.bf16.mxu0 0
  %1237 = vmatpush2.bf16.msra.mxu0 0
  %1238 = vmatprep.mubr.bf16.mxu0 0
  %1239 = vmatmul.mubr.bf16.gmra.mxu0 %v640
  %v1240 = vpop.f32.mrf.mxu0
  %v1241 = vadd.f32 0.0, %v1240
  %v1242 = vpop.f32.mrf.mxu0
  %v1243 = vadd.f32 0.0, %v1242
  %v1244 = vpop.f32.mrf.mxu0
  %v1245 = vadd.f32 0.0, %v1244
  %v1246 = vpop.f32.mrf.mxu0
  %v1247 = vadd.f32 0.0, %v1246
  %1248 = vmatprep.mubr.bf16.mxu0 0
  %1249 = vmatmul.mubr.bf16.gmra.mxu0 %v641
  %v1250 = vpop.f32.mrf.mxu0
  %v1251 = vadd.f32 0.0, %v1250
  %v1252 = vpop.f32.mrf.mxu0
  %v1253 = vadd.f32 0.0, %v1252
  %v1254 = vpop.f32.mrf.mxu0
  %v1255 = vadd.f32 0.0, %v1254
  %v1256 = vpop.f32.mrf.mxu0
  %v1257 = vadd.f32 0.0, %v1256
  %1258 = vdwg.mxu0
  %v1259 = vadd.f32 %v1101, %v1241
  %v1260 = vadd.f32 %v1102, %v1243
  %v1261 = vadd.f32 %v1103, %v1245
  %v1262 = vadd.f32 %v1104, %v1247
  %v1263 = vadd.f32 %v1105, %v1251
  %v1264 = vadd.f32 %v1106, %v1253
  %v1265 = vadd.f32 %v1107, %v1255
  %v1266 = vadd.f32 %v1108, %v1257
  %s1267 = scalar_lea.vmem %s3, 512
  %v1268 = vld [vmem:[%s1267] sm:$0xff]
  %v1269 = vld [vmem:[%s1267 + $0x8] sm:$0xff]
  %v1270 = vld [vmem:[%s1267 + $0x10] sm:$0xff]
  %v1271 = vld [vmem:[%s1267 + $0x18] sm:$0xff]
  %v1272 = vld [vmem:[%s1267 + $0x20] sm:$0xff]
  %v1273 = vld [vmem:[%s1267 + $0x28] sm:$0xff]
  %v1274 = vld [vmem:[%s1267 + $0x30] sm:$0xff]
  %v1275 = vld [vmem:[%s1267 + $0x38] sm:$0xff]
  %v1276 = vld [vmem:[%s1267 + $0x40] sm:$0xff]
  %v1277 = vld [vmem:[%s1267 + $0x48] sm:$0xff]
  %v1278 = vld [vmem:[%s1267 + $0x50] sm:$0xff]
  %v1279 = vld [vmem:[%s1267 + $0x58] sm:$0xff]
  %v1280 = vld [vmem:[%s1267 + $0x60] sm:$0xff]
  %v1281 = vld [vmem:[%s1267 + $0x68] sm:$0xff]
  %v1282 = vld [vmem:[%s1267 + $0x70] sm:$0xff]
  %v1283 = vld [vmem:[%s1267 + $0x78] sm:$0xff]
  %v1300 = vunpack.c.l.b16 %v1268
  %v1301 = vunpack.c.h.b16 %v1268
  %v1302 = vunpack.c.l.b16 %v1269
  %v1303 = vunpack.c.h.b16 %v1269
  %v1304 = vunpack.c.l.b16 %v1270
  %v1305 = vunpack.c.h.b16 %v1270
  %v1306 = vunpack.c.l.b16 %v1271
  %v1307 = vunpack.c.h.b16 %v1271
  %v1308 = vunpack.c.l.b16 %v1272
  %v1309 = vunpack.c.h.b16 %v1272
  %v1310 = vunpack.c.l.b16 %v1273
  %v1311 = vunpack.c.h.b16 %v1273
  %v1312 = vunpack.c.l.b16 %v1274
  %v1313 = vunpack.c.h.b16 %v1274
  %v1314 = vunpack.c.l.b16 %v1275
  %v1315 = vunpack.c.h.b16 %v1275
  %v1316 = vunpack.c.l.b16 %v1276
  %v1317 = vunpack.c.h.b16 %v1276
  %v1318 = vunpack.c.l.b16 %v1277
  %v1319 = vunpack.c.h.b16 %v1277
  %v1320 = vunpack.c.l.b16 %v1278
  %v1321 = vunpack.c.h.b16 %v1278
  %v1322 = vunpack.c.l.b16 %v1279
  %v1323 = vunpack.c.h.b16 %v1279
  %v1324 = vunpack.c.l.b16 %v1280
  %v1325 = vunpack.c.h.b16 %v1280
  %v1326 = vunpack.c.l.b16 %v1281
  %v1327 = vunpack.c.h.b16 %v1281
  %v1328 = vunpack.c.l.b16 %v1282
  %v1329 = vunpack.c.h.b16 %v1282
  %v1330 = vunpack.c.l.b16 %v1283
  %v1331 = vunpack.c.h.b16 %v1283
  %v1332 = vpack.c.b16 %v1302, %v1300
  %v1333 = vpack.c.b16 %v1303, %v1301
  %v1334 = vpack.c.b16 %v1306, %v1304
  %v1335 = vpack.c.b16 %v1307, %v1305
  %v1336 = vpack.c.b16 %v1310, %v1308
  %v1337 = vpack.c.b16 %v1311, %v1309
  %v1338 = vpack.c.b16 %v1314, %v1312
  %v1339 = vpack.c.b16 %v1315, %v1313
  %v1340 = vpack.c.b16 %v1318, %v1316
  %v1341 = vpack.c.b16 %v1319, %v1317
  %v1342 = vpack.c.b16 %v1322, %v1320
  %v1343 = vpack.c.b16 %v1323, %v1321
  %v1344 = vpack.c.b16 %v1326, %v1324
  %v1345 = vpack.c.b16 %v1327, %v1325
  %v1346 = vpack.c.b16 %v1330, %v1328
  %v1347 = vpack.c.b16 %v1331, %v1329
  %1364 = vmatprep.subr.bf16.mxu0 %v1347
  %1365 = vmatpush1.bf16.msra.mxu0 %v1346
  %1366 = vmatprep.subr.bf16.mxu0 %v1345
  %1367 = vmatpush1.bf16.msra.mxu0 %v1344
  %1368 = vmatprep.subr.bf16.mxu0 %v1343
  %1369 = vmatpush1.bf16.msra.mxu0 %v1342
  %1370 = vmatprep.subr.bf16.mxu0 %v1341
  %1371 = vmatpush1.bf16.msra.mxu0 %v1340
  %1372 = vmatprep.subr.bf16.mxu0 %v1339
  %1373 = vmatpush1.bf16.msra.mxu0 %v1338
  %1374 = vmatprep.subr.bf16.mxu0 %v1337
  %1375 = vmatpush1.bf16.msra.mxu0 %v1336
  %1376 = vmatprep.subr.bf16.mxu0 %v1335
  %1377 = vmatpush1.bf16.msra.mxu0 %v1334
  %1378 = vmatprep.subr.bf16.mxu0 %v1333
  %1379 = vmatpush1.bf16.msra.mxu0 %v1332
  %1380 = vmatprep.subr.bf16.mxu0 0
  %1381 = vmatpush2.bf16.msra.mxu0 0
  %1382 = vmatprep.subr.bf16.mxu0 0
  %1383 = vmatpush2.bf16.msra.mxu0 0
  %1384 = vmatprep.subr.bf16.mxu0 0
  %1385 = vmatpush2.bf16.msra.mxu0 0
  %1386 = vmatprep.subr.bf16.mxu0 0
  %1387 = vmatpush2.bf16.msra.mxu0 0
  %1388 = vmatprep.subr.bf16.mxu0 0
  %1389 = vmatpush2.bf16.msra.mxu0 0
  %1390 = vmatprep.subr.bf16.mxu0 0
  %1391 = vmatpush2.bf16.msra.mxu0 0
  %1392 = vmatprep.subr.bf16.mxu0 0
  %1393 = vmatpush2.bf16.msra.mxu0 0
  %1394 = vmatprep.subr.bf16.mxu0 0
  %1395 = vmatpush2.bf16.msra.mxu0 0
  %1396 = vmatprep.mubr.bf16.mxu0 0
  %1397 = vmatmul.mubr.bf16.gmra.mxu0 %v642
  %v1398 = vpop.f32.mrf.mxu0
  %v1399 = vadd.f32 0.0, %v1398
  %v1400 = vpop.f32.mrf.mxu0
  %v1401 = vadd.f32 0.0, %v1400
  %v1402 = vpop.f32.mrf.mxu0
  %v1403 = vadd.f32 0.0, %v1402
  %v1404 = vpop.f32.mrf.mxu0
  %v1405 = vadd.f32 0.0, %v1404
  %1406 = vmatprep.mubr.bf16.mxu0 0
  %1407 = vmatmul.mubr.bf16.gmra.mxu0 %v643
  %v1408 = vpop.f32.mrf.mxu0
  %v1409 = vadd.f32 0.0, %v1408
  %v1410 = vpop.f32.mrf.mxu0
  %v1411 = vadd.f32 0.0, %v1410
  %v1412 = vpop.f32.mrf.mxu0
  %v1413 = vadd.f32 0.0, %v1412
  %v1414 = vpop.f32.mrf.mxu0
  %v1415 = vadd.f32 0.0, %v1414
  %1416 = vdwg.mxu0
  %v1417 = vadd.f32 %v1259, %v1399
  %v1418 = vadd.f32 %v1260, %v1401
  %v1419 = vadd.f32 %v1261, %v1403
  %v1420 = vadd.f32 %v1262, %v1405
  %v1421 = vadd.f32 %v1263, %v1409
  %v1422 = vadd.f32 %v1264, %v1411
  %v1423 = vadd.f32 %v1265, %v1413
  %v1424 = vadd.f32 %v1266, %v1415
  %s1425 = scalar_lea.vmem %s3, 640
  %v1426 = vld [vmem:[%s1425] sm:$0xff]
  %v1427 = vld [vmem:[%s1425 + $0x8] sm:$0xff]
  %v1428 = vld [vmem:[%s1425 + $0x10] sm:$0xff]
  %v1429 = vld [vmem:[%s1425 + $0x18] sm:$0xff]
  %v1430 = vld [vmem:[%s1425 + $0x20] sm:$0xff]
  %v1431 = vld [vmem:[%s1425 + $0x28] sm:$0xff]
  %v1432 = vld [vmem:[%s1425 + $0x30] sm:$0xff]
  %v1433 = vld [vmem:[%s1425 + $0x38] sm:$0xff]
  %v1434 = vld [vmem:[%s1425 + $0x40] sm:$0xff]
  %v1435 = vld [vmem:[%s1425 + $0x48] sm:$0xff]
  %v1436 = vld [vmem:[%s1425 + $0x50] sm:$0xff]
  %v1437 = vld [vmem:[%s1425 + $0x58] sm:$0xff]
  %v1438 = vld [vmem:[%s1425 + $0x60] sm:$0xff]
  %v1439 = vld [vmem:[%s1425 + $0x68] sm:$0xff]
  %v1440 = vld [vmem:[%s1425 + $0x70] sm:$0xff]
  %v1441 = vld [vmem:[%s1425 + $0x78] sm:$0xff]
  %v1458 = vunpack.c.l.b16 %v1426
  %v1459 = vunpack.c.h.b16 %v1426
  %v1460 = vunpack.c.l.b16 %v1427
  %v1461 = vunpack.c.h.b16 %v1427
  %v1462 = vunpack.c.l.b16 %v1428
  %v1463 = vunpack.c.h.b16 %v1428
  %v1464 = vunpack.c.l.b16 %v1429
  %v1465 = vunpack.c.h.b16 %v1429
  %v1466 = vunpack.c.l.b16 %v1430
  %v1467 = vunpack.c.h.b16 %v1430
  %v1468 = vunpack.c.l.b16 %v1431
  %v1469 = vunpack.c.h.b16 %v1431
  %v1470 = vunpack.c.l.b16 %v1432
  %v1471 = vunpack.c.h.b16 %v1432
  %v1472 = vunpack.c.l.b16 %v1433
  %v1473 = vunpack.c.h.b16 %v1433
  %v1474 = vunpack.c.l.b16 %v1434
  %v1475 = vunpack.c.h.b16 %v1434
  %v1476 = vunpack.c.l.b16 %v1435
  %v1477 = vunpack.c.h.b16 %v1435
  %v1478 = vunpack.c.l.b16 %v1436
  %v1479 = vunpack.c.h.b16 %v1436
  %v1480 = vunpack.c.l.b16 %v1437
  %v1481 = vunpack.c.h.b16 %v1437
  %v1482 = vunpack.c.l.b16 %v1438
  %v1483 = vunpack.c.h.b16 %v1438
  %v1484 = vunpack.c.l.b16 %v1439
  %v1485 = vunpack.c.h.b16 %v1439
  %v1486 = vunpack.c.l.b16 %v1440
  %v1487 = vunpack.c.h.b16 %v1440
  %v1488 = vunpack.c.l.b16 %v1441
  %v1489 = vunpack.c.h.b16 %v1441
  %v1490 = vpack.c.b16 %v1460, %v1458
  %v1491 = vpack.c.b16 %v1461, %v1459
  %v1492 = vpack.c.b16 %v1464, %v1462
  %v1493 = vpack.c.b16 %v1465, %v1463
  %v1494 = vpack.c.b16 %v1468, %v1466
  %v1495 = vpack.c.b16 %v1469, %v1467
  %v1496 = vpack.c.b16 %v1472, %v1470
  %v1497 = vpack.c.b16 %v1473, %v1471
  %v1498 = vpack.c.b16 %v1476, %v1474
  %v1499 = vpack.c.b16 %v1477, %v1475
  %v1500 = vpack.c.b16 %v1480, %v1478
  %v1501 = vpack.c.b16 %v1481, %v1479
  %v1502 = vpack.c.b16 %v1484, %v1482
  %v1503 = vpack.c.b16 %v1485, %v1483
  %v1504 = vpack.c.b16 %v1488, %v1486
  %v1505 = vpack.c.b16 %v1489, %v1487
  %1522 = vmatprep.subr.bf16.mxu0 %v1505
  %1523 = vmatpush1.bf16.msra.mxu0 %v1504
  %1524 = vmatprep.subr.bf16.mxu0 %v1503
  %1525 = vmatpush1.bf16.msra.mxu0 %v1502
  %1526 = vmatprep.subr.bf16.mxu0 %v1501
  %1527 = vmatpush1.bf16.msra.mxu0 %v1500
  %1528 = vmatprep.subr.bf16.mxu0 %v1499
  %1529 = vmatpush1.bf16.msra.mxu0 %v1498
  %1530 = vmatprep.subr.bf16.mxu0 %v1497
  %1531 = vmatpush1.bf16.msra.mxu0 %v1496
  %1532 = vmatprep.subr.bf16.mxu0 %v1495
  %1533 = vmatpush1.bf16.msra.mxu0 %v1494
  %1534 = vmatprep.subr.bf16.mxu0 %v1493
  %1535 = vmatpush1.bf16.msra.mxu0 %v1492
  %1536 = vmatprep.subr.bf16.mxu0 %v1491
  %1537 = vmatpush1.bf16.msra.mxu0 %v1490
  %1538 = vmatprep.subr.bf16.mxu0 0
  %1539 = vmatpush2.bf16.msra.mxu0 0
  %1540 = vmatprep.subr.bf16.mxu0 0
  %1541 = vmatpush2.bf16.msra.mxu0 0
  %1542 = vmatprep.subr.bf16.mxu0 0
  %1543 = vmatpush2.bf16.msra.mxu0 0
  %1544 = vmatprep.subr.bf16.mxu0 0
  %1545 = vmatpush2.bf16.msra.mxu0 0
  %1546 = vmatprep.subr.bf16.mxu0 0
  %1547 = vmatpush2.bf16.msra.mxu0 0
  %1548 = vmatprep.subr.bf16.mxu0 0
  %1549 = vmatpush2.bf16.msra.mxu0 0
  %1550 = vmatprep.subr.bf16.mxu0 0
  %1551 = vmatpush2.bf16.msra.mxu0 0
  %1552 = vmatprep.subr.bf16.mxu0 0
  %1553 = vmatpush2.bf16.msra.mxu0 0
  %1554 = vmatprep.mubr.bf16.mxu0 0
  %1555 = vmatmul.mubr.bf16.gmra.mxu0 %v644
  %v1556 = vpop.f32.mrf.mxu0
  %v1557 = vadd.f32 0.0, %v1556
  %v1558 = vpop.f32.mrf.mxu0
  %v1559 = vadd.f32 0.0, %v1558
  %v1560 = vpop.f32.mrf.mxu0
  %v1561 = vadd.f32 0.0, %v1560
  %v1562 = vpop.f32.mrf.mxu0
  %v1563 = vadd.f32 0.0, %v1562
  %1564 = vmatprep.mubr.bf16.mxu0 0
  %1565 = vmatmul.mubr.bf16.gmra.mxu0 %v645
  %v1566 = vpop.f32.mrf.mxu0
  %v1567 = vadd.f32 0.0, %v1566
  %v1568 = vpop.f32.mrf.mxu0
  %v1569 = vadd.f32 0.0, %v1568
  %v1570 = vpop.f32.mrf.mxu0
  %v1571 = vadd.f32 0.0, %v1570
  %v1572 = vpop.f32.mrf.mxu0
  %v1573 = vadd.f32 0.0, %v1572
  %1574 = vdwg.mxu0
  %v1575 = vadd.f32 %v1417, %v1557
  %v1576 = vadd.f32 %v1418, %v1559
  %v1577 = vadd.f32 %v1419, %v1561
  %v1578 = vadd.f32 %v1420, %v1563
  %v1579 = vadd.f32 %v1421, %v1567
  %v1580 = vadd.f32 %v1422, %v1569
  %v1581 = vadd.f32 %v1423, %v1571
  %v1582 = vadd.f32 %v1424, %v1573
  %s1583 = scalar_lea.vmem %s3, 768
  %v1584 = vld [vmem:[%s1583] sm:$0xff]
  %v1585 = vld [vmem:[%s1583 + $0x8] sm:$0xff]
  %v1586 = vld [vmem:[%s1583 + $0x10] sm:$0xff]
  %v1587 = vld [vmem:[%s1583 + $0x18] sm:$0xff]
  %v1588 = vld [vmem:[%s1583 + $0x20] sm:$0xff]
  %v1589 = vld [vmem:[%s1583 + $0x28] sm:$0xff]
  %v1590 = vld [vmem:[%s1583 + $0x30] sm:$0xff]
  %v1591 = vld [vmem:[%s1583 + $0x38] sm:$0xff]
  %v1592 = vld [vmem:[%s1583 + $0x40] sm:$0xff]
  %v1593 = vld [vmem:[%s1583 + $0x48] sm:$0xff]
  %v1594 = vld [vmem:[%s1583 + $0x50] sm:$0xff]
  %v1595 = vld [vmem:[%s1583 + $0x58] sm:$0xff]
  %v1596 = vld [vmem:[%s1583 + $0x60] sm:$0xff]
  %v1597 = vld [vmem:[%s1583 + $0x68] sm:$0xff]
  %v1598 = vld [vmem:[%s1583 + $0x70] sm:$0xff]
  %v1599 = vld [vmem:[%s1583 + $0x78] sm:$0xff]
  %v1616 = vunpack.c.l.b16 %v1584
  %v1617 = vunpack.c.h.b16 %v1584
  %v1618 = vunpack.c.l.b16 %v1585
  %v1619 = vunpack.c.h.b16 %v1585
  %v1620 = vunpack.c.l.b16 %v1586
  %v1621 = vunpack.c.h.b16 %v1586
  %v1622 = vunpack.c.l.b16 %v1587
  %v1623 = vunpack.c.h.b16 %v1587
  %v1624 = vunpack.c.l.b16 %v1588
  %v1625 = vunpack.c.h.b16 %v1588
  %v1626 = vunpack.c.l.b16 %v1589
  %v1627 = vunpack.c.h.b16 %v1589
  %v1628 = vunpack.c.l.b16 %v1590
  %v1629 = vunpack.c.h.b16 %v1590
  %v1630 = vunpack.c.l.b16 %v1591
  %v1631 = vunpack.c.h.b16 %v1591
  %v1632 = vunpack.c.l.b16 %v1592
  %v1633 = vunpack.c.h.b16 %v1592
  %v1634 = vunpack.c.l.b16 %v1593
  %v1635 = vunpack.c.h.b16 %v1593
  %v1636 = vunpack.c.l.b16 %v1594
  %v1637 = vunpack.c.h.b16 %v1594
  %v1638 = vunpack.c.l.b16 %v1595
  %v1639 = vunpack.c.h.b16 %v1595
  %v1640 = vunpack.c.l.b16 %v1596
  %v1641 = vunpack.c.h.b16 %v1596
  %v1642 = vunpack.c.l.b16 %v1597
  %v1643 = vunpack.c.h.b16 %v1597
  %v1644 = vunpack.c.l.b16 %v1598
  %v1645 = vunpack.c.h.b16 %v1598
  %v1646 = vunpack.c.l.b16 %v1599
  %v1647 = vunpack.c.h.b16 %v1599
  %v1648 = vpack.c.b16 %v1618, %v1616
  %v1649 = vpack.c.b16 %v1619, %v1617
  %v1650 = vpack.c.b16 %v1622, %v1620
  %v1651 = vpack.c.b16 %v1623, %v1621
  %v1652 = vpack.c.b16 %v1626, %v1624
  %v1653 = vpack.c.b16 %v1627, %v1625
  %v1654 = vpack.c.b16 %v1630, %v1628
  %v1655 = vpack.c.b16 %v1631, %v1629
  %v1656 = vpack.c.b16 %v1634, %v1632
  %v1657 = vpack.c.b16 %v1635, %v1633
  %v1658 = vpack.c.b16 %v1638, %v1636
  %v1659 = vpack.c.b16 %v1639, %v1637
  %v1660 = vpack.c.b16 %v1642, %v1640
  %v1661 = vpack.c.b16 %v1643, %v1641
  %v1662 = vpack.c.b16 %v1646, %v1644
  %v1663 = vpack.c.b16 %v1647, %v1645
  %1680 = vmatprep.subr.bf16.mxu0 %v1663
  %1681 = vmatpush1.bf16.msra.mxu0 %v1662
  %1682 = vmatprep.subr.bf16.mxu0 %v1661
  %1683 = vmatpush1.bf16.msra.mxu0 %v1660
  %1684 = vmatprep.subr.bf16.mxu0 %v1659
  %1685 = vmatpush1.bf16.msra.mxu0 %v1658
  %1686 = vmatprep.subr.bf16.mxu0 %v1657
  %1687 = vmatpush1.bf16.msra.mxu0 %v1656
  %1688 = vmatprep.subr.bf16.mxu0 %v1655
  %1689 = vmatpush1.bf16.msra.mxu0 %v1654
  %1690 = vmatprep.subr.bf16.mxu0 %v1653
  %1691 = vmatpush1.bf16.msra.mxu0 %v1652
  %1692 = vmatprep.subr.bf16.mxu0 %v1651
  %1693 = vmatpush1.bf16.msra.mxu0 %v1650
  %1694 = vmatprep.subr.bf16.mxu0 %v1649
  %1695 = vmatpush1.bf16.msra.mxu0 %v1648
  %1696 = vmatprep.subr.bf16.mxu0 0
  %1697 = vmatpush2.bf16.msra.mxu0 0
  %1698 = vmatprep.subr.bf16.mxu0 0
  %1699 = vmatpush2.bf16.msra.mxu0 0
  %1700 = vmatprep.subr.bf16.mxu0 0
  %1701 = vmatpush2.bf16.msra.mxu0 0
  %1702 = vmatprep.subr.bf16.mxu0 0
  %1703 = vmatpush2.bf16.msra.mxu0 0
  %1704 = vmatprep.subr.bf16.mxu0 0
  %1705 = vmatpush2.bf16.msra.mxu0 0
  %1706 = vmatprep.subr.bf16.mxu0 0
  %1707 = vmatpush2.bf16.msra.mxu0 0
  %1708 = vmatprep.subr.bf16.mxu0 0
  %1709 = vmatpush2.bf16.msra.mxu0 0
  %1710 = vmatprep.subr.bf16.mxu0 0
  %1711 = vmatpush2.bf16.msra.mxu0 0
  %1712 = vmatprep.mubr.bf16.mxu0 0
  %1713 = vmatmul.mubr.bf16.gmra.mxu0 %v646
  %v1714 = vpop.f32.mrf.mxu0
  %v1715 = vadd.f32 0.0, %v1714
  %v1716 = vpop.f32.mrf.mxu0
  %v1717 = vadd.f32 0.0, %v1716
  %v1718 = vpop.f32.mrf.mxu0
  %v1719 = vadd.f32 0.0, %v1718
  %v1720 = vpop.f32.mrf.mxu0
  %v1721 = vadd.f32 0.0, %v1720
  %1722 = vmatprep.mubr.bf16.mxu0 0
  %1723 = vmatmul.mubr.bf16.gmra.mxu0 %v647
  %v1724 = vpop.f32.mrf.mxu0
  %v1725 = vadd.f32 0.0, %v1724
  %v1726 = vpop.f32.mrf.mxu0
  %v1727 = vadd.f32 0.0, %v1726
  %v1728 = vpop.f32.mrf.mxu0
  %v1729 = vadd.f32 0.0, %v1728
  %v1730 = vpop.f32.mrf.mxu0
  %v1731 = vadd.f32 0.0, %v1730
  %1732 = vdwg.mxu0
  %v1733 = vadd.f32 %v1575, %v1715
  %v1734 = vadd.f32 %v1576, %v1717
  %v1735 = vadd.f32 %v1577, %v1719
  %v1736 = vadd.f32 %v1578, %v1721
  %v1737 = vadd.f32 %v1579, %v1725
  %v1738 = vadd.f32 %v1580, %v1727
  %v1739 = vadd.f32 %v1581, %v1729
  %v1740 = vadd.f32 %v1582, %v1731
  %s1741 = scalar_lea.vmem %s3, 896
  %v1742 = vld [vmem:[%s1741] sm:$0xff]
  %v1743 = vld [vmem:[%s1741 + $0x8] sm:$0xff]
  %v1744 = vld [vmem:[%s1741 + $0x10] sm:$0xff]
  %v1745 = vld [vmem:[%s1741 + $0x18] sm:$0xff]
  %v1746 = vld [vmem:[%s1741 + $0x20] sm:$0xff]
  %v1747 = vld [vmem:[%s1741 + $0x28] sm:$0xff]
  %v1748 = vld [vmem:[%s1741 + $0x30] sm:$0xff]
  %v1749 = vld [vmem:[%s1741 + $0x38] sm:$0xff]
  %v1750 = vld [vmem:[%s1741 + $0x40] sm:$0xff]
  %v1751 = vld [vmem:[%s1741 + $0x48] sm:$0xff]
  %v1752 = vld [vmem:[%s1741 + $0x50] sm:$0xff]
  %v1753 = vld [vmem:[%s1741 + $0x58] sm:$0xff]
  %v1754 = vld [vmem:[%s1741 + $0x60] sm:$0xff]
  %v1755 = vld [vmem:[%s1741 + $0x68] sm:$0xff]
  %v1756 = vld [vmem:[%s1741 + $0x70] sm:$0xff]
  %v1757 = vld [vmem:[%s1741 + $0x78] sm:$0xff]
  %v1774 = vunpack.c.l.b16 %v1742
  %v1775 = vunpack.c.h.b16 %v1742
  %v1776 = vunpack.c.l.b16 %v1743
  %v1777 = vunpack.c.h.b16 %v1743
  %v1778 = vunpack.c.l.b16 %v1744
  %v1779 = vunpack.c.h.b16 %v1744
  %v1780 = vunpack.c.l.b16 %v1745
  %v1781 = vunpack.c.h.b16 %v1745
  %v1782 = vunpack.c.l.b16 %v1746
  %v1783 = vunpack.c.h.b16 %v1746
  %v1784 = vunpack.c.l.b16 %v1747
  %v1785 = vunpack.c.h.b16 %v1747
  %v1786 = vunpack.c.l.b16 %v1748
  %v1787 = vunpack.c.h.b16 %v1748
  %v1788 = vunpack.c.l.b16 %v1749
  %v1789 = vunpack.c.h.b16 %v1749
  %v1790 = vunpack.c.l.b16 %v1750
  %v1791 = vunpack.c.h.b16 %v1750
  %v1792 = vunpack.c.l.b16 %v1751
  %v1793 = vunpack.c.h.b16 %v1751
  %v1794 = vunpack.c.l.b16 %v1752
  %v1795 = vunpack.c.h.b16 %v1752
  %v1796 = vunpack.c.l.b16 %v1753
  %v1797 = vunpack.c.h.b16 %v1753
  %v1798 = vunpack.c.l.b16 %v1754
  %v1799 = vunpack.c.h.b16 %v1754
  %v1800 = vunpack.c.l.b16 %v1755
  %v1801 = vunpack.c.h.b16 %v1755
  %v1802 = vunpack.c.l.b16 %v1756
  %v1803 = vunpack.c.h.b16 %v1756
  %v1804 = vunpack.c.l.b16 %v1757
  %v1805 = vunpack.c.h.b16 %v1757
  %v1806 = vpack.c.b16 %v1776, %v1774
  %v1807 = vpack.c.b16 %v1777, %v1775
  %v1808 = vpack.c.b16 %v1780, %v1778
  %v1809 = vpack.c.b16 %v1781, %v1779
  %v1810 = vpack.c.b16 %v1784, %v1782
  %v1811 = vpack.c.b16 %v1785, %v1783
  %v1812 = vpack.c.b16 %v1788, %v1786
  %v1813 = vpack.c.b16 %v1789, %v1787
  %v1814 = vpack.c.b16 %v1792, %v1790
  %v1815 = vpack.c.b16 %v1793, %v1791
  %v1816 = vpack.c.b16 %v1796, %v1794
  %v1817 = vpack.c.b16 %v1797, %v1795
  %v1818 = vpack.c.b16 %v1800, %v1798
  %v1819 = vpack.c.b16 %v1801, %v1799
  %v1820 = vpack.c.b16 %v1804, %v1802
  %v1821 = vpack.c.b16 %v1805, %v1803
  %1838 = vmatprep.subr.bf16.mxu0 %v1821
  %1839 = vmatpush1.bf16.msra.mxu0 %v1820
  %1840 = vmatprep.subr.bf16.mxu0 %v1819
  %1841 = vmatpush1.bf16.msra.mxu0 %v1818
  %1842 = vmatprep.subr.bf16.mxu0 %v1817
  %1843 = vmatpush1.bf16.msra.mxu0 %v1816
  %1844 = vmatprep.subr.bf16.mxu0 %v1815
  %1845 = vmatpush1.bf16.msra.mxu0 %v1814
  %1846 = vmatprep.subr.bf16.mxu0 %v1813
  %1847 = vmatpush1.bf16.msra.mxu0 %v1812
  %1848 = vmatprep.subr.bf16.mxu0 %v1811
  %1849 = vmatpush1.bf16.msra.mxu0 %v1810
  %1850 = vmatprep.subr.bf16.mxu0 %v1809
  %1851 = vmatpush1.bf16.msra.mxu0 %v1808
  %1852 = vmatprep.subr.bf16.mxu0 %v1807
  %1853 = vmatpush1.bf16.msra.mxu0 %v1806
  %1854 = vmatprep.subr.bf16.mxu0 0
  %1855 = vmatpush2.bf16.msra.mxu0 0
  %1856 = vmatprep.subr.bf16.mxu0 0
  %1857 = vmatpush2.bf16.msra.mxu0 0
  %1858 = vmatprep.subr.bf16.mxu0 0
  %1859 = vmatpush2.bf16.msra.mxu0 0
  %1860 = vmatprep.subr.bf16.mxu0 0
  %1861 = vmatpush2.bf16.msra.mxu0 0
  %1862 = vmatprep.subr.bf16.mxu0 0
  %1863 = vmatpush2.bf16.msra.mxu0 0
  %1864 = vmatprep.subr.bf16.mxu0 0
  %1865 = vmatpush2.bf16.msra.mxu0 0
  %1866 = vmatprep.subr.bf16.mxu0 0
  %1867 = vmatpush2.bf16.msra.mxu0 0
  %1868 = vmatprep.subr.bf16.mxu0 0
  %1869 = vmatpush2.bf16.msra.mxu0 0
  %1870 = vmatprep.mubr.bf16.mxu0 0
  %1871 = vmatmul.mubr.bf16.gmra.mxu0 %v648
  %v1872 = vpop.f32.mrf.mxu0
  %v1873 = vadd.f32 0.0, %v1872
  %v1874 = vpop.f32.mrf.mxu0
  %v1875 = vadd.f32 0.0, %v1874
  %v1876 = vpop.f32.mrf.mxu0
  %v1877 = vadd.f32 0.0, %v1876
  %v1878 = vpop.f32.mrf.mxu0
  %v1879 = vadd.f32 0.0, %v1878
  %1880 = vmatprep.mubr.bf16.mxu0 0
  %1881 = vmatmul.mubr.bf16.gmra.mxu0 %v649
  %v1882 = vpop.f32.mrf.mxu0
  %v1883 = vadd.f32 0.0, %v1882
  %v1884 = vpop.f32.mrf.mxu0
  %v1885 = vadd.f32 0.0, %v1884
  %v1886 = vpop.f32.mrf.mxu0
  %v1887 = vadd.f32 0.0, %v1886
  %v1888 = vpop.f32.mrf.mxu0
  %v1889 = vadd.f32 0.0, %v1888
  %1890 = vdwg.mxu0
  %v1891 = vadd.f32 %v1733, %v1873
  %v1892 = vadd.f32 %v1734, %v1875
  %v1893 = vadd.f32 %v1735, %v1877
  %v1894 = vadd.f32 %v1736, %v1879
  %v1895 = vadd.f32 %v1737, %v1883
  %v1896 = vadd.f32 %v1738, %v1885
  %v1897 = vadd.f32 %v1739, %v1887
  %v1898 = vadd.f32 %v1740, %v1889
  %s1899 = scalar_lea.vmem %s3, 1024
  %v1900 = vld [vmem:[%s1899] sm:$0xff]
  %v1901 = vld [vmem:[%s1899 + $0x8] sm:$0xff]
  %v1902 = vld [vmem:[%s1899 + $0x10] sm:$0xff]
  %v1903 = vld [vmem:[%s1899 + $0x18] sm:$0xff]
  %v1904 = vld [vmem:[%s1899 + $0x20] sm:$0xff]
  %v1905 = vld [vmem:[%s1899 + $0x28] sm:$0xff]
  %v1906 = vld [vmem:[%s1899 + $0x30] sm:$0xff]
  %v1907 = vld [vmem:[%s1899 + $0x38] sm:$0xff]
  %v1908 = vld [vmem:[%s1899 + $0x40] sm:$0xff]
  %v1909 = vld [vmem:[%s1899 + $0x48] sm:$0xff]
  %v1910 = vld [vmem:[%s1899 + $0x50] sm:$0xff]
  %v1911 = vld [vmem:[%s1899 + $0x58] sm:$0xff]
  %v1912 = vld [vmem:[%s1899 + $0x60] sm:$0xff]
  %v1913 = vld [vmem:[%s1899 + $0x68] sm:$0xff]
  %v1914 = vld [vmem:[%s1899 + $0x70] sm:$0xff]
  %v1915 = vld [vmem:[%s1899 + $0x78] sm:$0xff]
  %v1932 = vunpack.c.l.b16 %v1900
  %v1933 = vunpack.c.h.b16 %v1900
  %v1934 = vunpack.c.l.b16 %v1901
  %v1935 = vunpack.c.h.b16 %v1901
  %v1936 = vunpack.c.l.b16 %v1902
  %v1937 = vunpack.c.h.b16 %v1902
  %v1938 = vunpack.c.l.b16 %v1903
  %v1939 = vunpack.c.h.b16 %v1903
  %v1940 = vunpack.c.l.b16 %v1904
  %v1941 = vunpack.c.h.b16 %v1904
  %v1942 = vunpack.c.l.b16 %v1905
  %v1943 = vunpack.c.h.b16 %v1905
  %v1944 = vunpack.c.l.b16 %v1906
  %v1945 = vunpack.c.h.b16 %v1906
  %v1946 = vunpack.c.l.b16 %v1907
  %v1947 = vunpack.c.h.b16 %v1907
  %v1948 = vunpack.c.l.b16 %v1908
  %v1949 = vunpack.c.h.b16 %v1908
  %v1950 = vunpack.c.l.b16 %v1909
  %v1951 = vunpack.c.h.b16 %v1909
  %v1952 = vunpack.c.l.b16 %v1910
  %v1953 = vunpack.c.h.b16 %v1910
  %v1954 = vunpack.c.l.b16 %v1911
  %v1955 = vunpack.c.h.b16 %v1911
  %v1956 = vunpack.c.l.b16 %v1912
  %v1957 = vunpack.c.h.b16 %v1912
  %v1958 = vunpack.c.l.b16 %v1913
  %v1959 = vunpack.c.h.b16 %v1913
  %v1960 = vunpack.c.l.b16 %v1914
  %v1961 = vunpack.c.h.b16 %v1914
  %v1962 = vunpack.c.l.b16 %v1915
  %v1963 = vunpack.c.h.b16 %v1915
  %v1964 = vpack.c.b16 %v1934, %v1932
  %v1965 = vpack.c.b16 %v1935, %v1933
  %v1966 = vpack.c.b16 %v1938, %v1936
  %v1967 = vpack.c.b16 %v1939, %v1937
  %v1968 = vpack.c.b16 %v1942, %v1940
  %v1969 = vpack.c.b16 %v1943, %v1941
  %v1970 = vpack.c.b16 %v1946, %v1944
  %v1971 = vpack.c.b16 %v1947, %v1945
  %v1972 = vpack.c.b16 %v1950, %v1948
  %v1973 = vpack.c.b16 %v1951, %v1949
  %v1974 = vpack.c.b16 %v1954, %v1952
  %v1975 = vpack.c.b16 %v1955, %v1953
  %v1976 = vpack.c.b16 %v1958, %v1956
  %v1977 = vpack.c.b16 %v1959, %v1957
  %v1978 = vpack.c.b16 %v1962, %v1960
  %v1979 = vpack.c.b16 %v1963, %v1961
  %1996 = vmatprep.subr.bf16.mxu0 %v1979
  %1997 = vmatpush1.bf16.msra.mxu0 %v1978
  %1998 = vmatprep.subr.bf16.mxu0 %v1977
  %1999 = vmatpush1.bf16.msra.mxu0 %v1976
  %2000 = vmatprep.subr.bf16.mxu0 %v1975
  %2001 = vmatpush1.bf16.msra.mxu0 %v1974
  %2002 = vmatprep.subr.bf16.mxu0 %v1973
  %2003 = vmatpush1.bf16.msra.mxu0 %v1972
  %2004 = vmatprep.subr.bf16.mxu0 %v1971
  %2005 = vmatpush1.bf16.msra.mxu0 %v1970
  %2006 = vmatprep.subr.bf16.mxu0 %v1969
  %2007 = vmatpush1.bf16.msra.mxu0 %v1968
  %2008 = vmatprep.subr.bf16.mxu0 %v1967
  %2009 = vmatpush1.bf16.msra.mxu0 %v1966
  %2010 = vmatprep.subr.bf16.mxu0 %v1965
  %2011 = vmatpush1.bf16.msra.mxu0 %v1964
  %2012 = vmatprep.subr.bf16.mxu0 0
  %2013 = vmatpush2.bf16.msra.mxu0 0
  %2014 = vmatprep.subr.bf16.mxu0 0
  %2015 = vmatpush2.bf16.msra.mxu0 0
  %2016 = vmatprep.subr.bf16.mxu0 0
  %2017 = vmatpush2.bf16.msra.mxu0 0
  %2018 = vmatprep.subr.bf16.mxu0 0
  %2019 = vmatpush2.bf16.msra.mxu0 0
  %2020 = vmatprep.subr.bf16.mxu0 0
  %2021 = vmatpush2.bf16.msra.mxu0 0
  %2022 = vmatprep.subr.bf16.mxu0 0
  %2023 = vmatpush2.bf16.msra.mxu0 0
  %2024 = vmatprep.subr.bf16.mxu0 0
  %2025 = vmatpush2.bf16.msra.mxu0 0
  %2026 = vmatprep.subr.bf16.mxu0 0
  %2027 = vmatpush2.bf16.msra.mxu0 0
  %2028 = vmatprep.mubr.bf16.mxu0 0
  %2029 = vmatmul.mubr.bf16.gmra.mxu0 %v650
  %v2030 = vpop.f32.mrf.mxu0
  %v2031 = vadd.f32 0.0, %v2030
  %v2032 = vpop.f32.mrf.mxu0
  %v2033 = vadd.f32 0.0, %v2032
  %v2034 = vpop.f32.mrf.mxu0
  %v2035 = vadd.f32 0.0, %v2034
  %v2036 = vpop.f32.mrf.mxu0
  %v2037 = vadd.f32 0.0, %v2036
  %2038 = vmatprep.mubr.bf16.mxu0 0
  %2039 = vmatmul.mubr.bf16.gmra.mxu0 %v651
  %v2040 = vpop.f32.mrf.mxu0
  %v2041 = vadd.f32 0.0, %v2040
  %v2042 = vpop.f32.mrf.mxu0
  %v2043 = vadd.f32 0.0, %v2042
  %v2044 = vpop.f32.mrf.mxu0
  %v2045 = vadd.f32 0.0, %v2044
  %v2046 = vpop.f32.mrf.mxu0
  %v2047 = vadd.f32 0.0, %v2046
  %2048 = vdwg.mxu0
  %v2049 = vadd.f32 %v1891, %v2031
  %v2050 = vadd.f32 %v1892, %v2033
  %v2051 = vadd.f32 %v1893, %v2035
  %v2052 = vadd.f32 %v1894, %v2037
  %v2053 = vadd.f32 %v1895, %v2041
  %v2054 = vadd.f32 %v1896, %v2043
  %v2055 = vadd.f32 %v1897, %v2045
  %v2056 = vadd.f32 %v1898, %v2047
  %v2057 = vld [vmem:[%s4] sm:$0x3]
  %v2059 = vlaneseq
  %v2060 = vshrl.u32 %v2059, 7
  %v2061 = vsub.s32 0, %v2060
  %v2062 = vrot.slane %v2057, %v2061
  %v2063 = vlaneseq
  %v2064 = vshrl.u32 %v2063, 7
  %v2065 = vsub.s32 1, %v2064
  %v2066 = vrot.slane %v2057, %v2065
  %v2069 = vmul.f32 %v2049, %v2062
  %v2070 = vmul.f32 %v2050, %v2066
  %v2071 = vmul.f32 %v2051, %v2062
  %v2072 = vmul.f32 %v2052, %v2066
  %v2073 = vmul.f32 %v2053, %v2062
  %v2074 = vmul.f32 %v2054, %v2066
  %v2075 = vmul.f32 %v2055, %v2062
  %v2076 = vmul.f32 %v2056, %v2066
  %v2077 = vld [vmem:[%s5] sm:$0x3]
  %v2079 = vlaneseq
  %v2080 = vshrl.u32 %v2079, 7
  %v2081 = vsub.s32 0, %v2080
  %v2082 = vrot.slane %v2077, %v2081
  %v2083 = vlaneseq
  %v2084 = vshrl.u32 %v2083, 7
  %v2085 = vsub.s32 1, %v2084
  %v2086 = vrot.slane %v2077, %v2085
  %v2089 = vadd.f32 %v2069, %v2082
  %v2090 = vadd.f32 %v2070, %v2086
  %v2091 = vadd.f32 %v2071, %v2082
  %v2092 = vadd.f32 %v2072, %v2086
  %v2093 = vadd.f32 %v2073, %v2082
  %v2094 = vadd.f32 %v2074, %v2086
  %v2095 = vadd.f32 %v2075, %v2082
  %v2096 = vadd.f32 %v2076, %v2086
  %vm2097 = vcmp.gt.f32.partialorder %v2089, 0.0
  %vm2098 = vcmp.gt.f32.partialorder %v2090, 0.0
  %vm2099 = vcmp.gt.f32.partialorder %v2091, 0.0
  %vm2100 = vcmp.gt.f32.partialorder %v2092, 0.0
  %vm2101 = vcmp.gt.f32.partialorder %v2093, 0.0
  %vm2102 = vcmp.gt.f32.partialorder %v2094, 0.0
  %vm2103 = vcmp.gt.f32.partialorder %v2095, 0.0
  %vm2104 = vcmp.gt.f32.partialorder %v2096, 0.0
  %v2105 = vmul.f32 %v2089, 0.2
  %v2106 = vmul.f32 %v2090, 0.2
  %v2107 = vmul.f32 %v2091, 0.2
  %v2108 = vmul.f32 %v2092, 0.2
  %v2109 = vmul.f32 %v2093, 0.2
  %v2110 = vmul.f32 %v2094, 0.2
  %v2111 = vmul.f32 %v2095, 0.2
  %v2112 = vmul.f32 %v2096, 0.2
  %v2113 = vsel %vm2097, %v2089, %v2105
  %v2114 = vsel %vm2098, %v2090, %v2106
  %v2115 = vsel %vm2099, %v2091, %v2107
  %v2116 = vsel %vm2100, %v2092, %v2108
  %v2117 = vsel %vm2101, %v2093, %v2109
  %v2118 = vsel %vm2102, %v2094, %v2110
  %v2119 = vsel %vm2103, %v2095, %v2111
  %v2120 = vsel %vm2104, %v2096, %v2112
  %v2121 = vld [vmem:[%s6] sm:$0xff]
  %v2122 = vld [vmem:[%s6 + $0x8] sm:$0xff]
  %v2123 = vld [vmem:[%s6 + $0x10] sm:$0xff]
  %v2124 = vld [vmem:[%s6 + $0x18] sm:$0xff]
  %v2125 = vmul.f32 %v2113, %v2121
  %v2126 = vmul.f32 %v2114, %v2122
  %v2127 = vmul.f32 %v2115, %v2123
  %v2128 = vmul.f32 %v2116, %v2124
  %v2129 = vmul.f32 %v2117, %v2121
  %v2130 = vmul.f32 %v2118, %v2122
  %v2131 = vmul.f32 %v2119, %v2123
  %v2132 = vmul.f32 %v2120, %v2124
  %v2133 = vadd.f32 %v2125, %v2126
  %2134 = vadd.xlane.f32.xlu0 %v2133
  %v2135 = vpop.xlane.xlu0 %2134
  %v2136 = vadd.f32 %v2127, %v2128
  %2137 = vadd.xlane.f32.xlu0 %v2136
  %v2138 = vpop.xlane.xlu0 %2137
  %v2139 = vadd.f32 %v2129, %v2130
  %2140 = vadd.xlane.f32.xlu0 %v2139
  %v2141 = vpop.xlane.xlu0 %2140
  %v2142 = vadd.f32 %v2131, %v2132
  %2143 = vadd.xlane.f32.xlu0 %v2142
  %v2144 = vpop.xlane.xlu0 %2143
  %v2149 = vlaneseq
  %v2150 = vand.u32 %v2149, 127
  %v2151 = vlaneseq
  %v2152 = vshrl.u32 %v2151, 7
  %v2153 = vsub.s32 %v2150, %v2152
  %v2154 = vrot.slane %v2135, %v2153
  %v2155 = vadd.s32 %v2150, 4294967288
  %v2156 = vlaneseq
  %v2157 = vshrl.u32 %v2156, 7
  %v2158 = vsub.s32 %v2155, %v2157
  %v2159 = vrot.slane %v2138, %v2158
  %vm2160 = vcmask 130112
  %v2161 = vsel %vm2160, %v2159, %v2154
  %v2162 = vlaneseq
  %v2163 = vshrl.u32 %v2162, 7
  %v2164 = vsub.s32 %v2150, %v2163
  %v2165 = vrot.slane %v2141, %v2164
  %v2166 = vlaneseq
  %v2167 = vshrl.u32 %v2166, 7
  %v2168 = vsub.s32 %v2155, %v2167
  %v2169 = vrot.slane %v2144, %v2168
  %v2170 = vsel %vm2160, %v2169, %v2165
  %vm2171 = vcmask 1041409
  %v2172 = vsel %vm2171, %v2170, %v2161
  %vm2174 = vcmask 123904
  %v2175 = vsel %vm2174, %v2172, 0.0
  %2176 = vadd.xlane.f32.xlu0 %v2175
  %v2177 = vpop.xlane.xlu0 %2176
  %v2178 = vld [vmem:[#allocation2] sm:$0x1]
  %v2180 = vlaneseq
  %v2181 = vshrl.u32 %v2180, 7
  %v2182 = vsub.s32 0, %v2181
  %v2183 = vrot.slane %v2178, %v2182
  %v2185 = vadd.f32 %v2177, %v2183
  %v2186 = vsub.f32 0.0, %v2185
  %v2187 = vmul.f32 %v2186, 1.442695
  %v2188 = vpow.pop %v2187
  %v2189 = vadd.f32 %v2188, 1.0
  %v2190 = vrcp.pop %v2189
  %v2191 = vmul.f32 1.0, %v2190
  %2193 = vset.pattern.permute.xlu0 0
  %2194 = vperm.xlu0 %2193, %v2191
  %v2195 = vpop.permute.xlu0 %2194
  %2197 = vst [vmem:[%s8] sm:$0x3] %v2195
  // Predicated region
  $region34: #{conditional_discriminator_forward.1} parent=0 // pred_check
    _
  $region35: #{conditional_discriminator_forward.1} parent=0 // pred_check_branch
    %2199 = sbr.rel (0) target = $region37
  $region36: #{conditional_discriminator_forward.1} parent=0 // pred_region
    _
  $region37: #{conditional_discriminator_forward.1} parent=0 // pred_fallthru
    _
  // Predicated region
  $region38: #{conditional_discriminator_forward.1} parent=0 // pred_check
    _
  $region39: #{conditional_discriminator_forward.1} parent=0 // pred_check_branch
    %2201 = sbr.rel (0) target = $region41
  $region40: #{conditional_discriminator_forward.1} parent=0 // pred_region
    _
  $region41: #{conditional_discriminator_forward.1} parent=0 // pred_fallthru
    _

</llo_original>
